<compile_context>
chip_gen: v7x
topology: tpu7x:2x2x1
jax: 0.10.0
libtpu: 0.0.40
codegen_flags: <defaults>
</compile_context>

<pallas_src>
import jax
import jax.numpy as jnp
from jax import lax
from jax.experimental import pallas as pl
from jax.experimental.pallas import tpu as pltpu


def _margin_loss_kernel(n_ref, par_ref, a_ref, p_ref, g_ref, beta_ref,
                        loss_ref, cnt_ref):
    i = pl.program_id(0)

    margin = par_ref[0]          # f32 scalar (SMEM, scalar-prefetched)
    nu_eff = par_ref[1]          # f32 scalar (SMEM)
    n_rows = n_ref[0]            # i32 scalar (SMEM): true batch size

    # Blocks are (TILE_N, D) in the arrays' natural layout; cast in-kernel so
    # bf16/fp16 inputs travel through HBM at half the bytes.
    a = a_ref[...].astype(jnp.float32)          # (TILE_N, D)
    p = p_ref[...].astype(jnp.float32)
    g = g_ref[...].astype(jnp.float32)
    beta = beta_ref[...].astype(jnp.float32)    # (1, TILE_N) lane-dense

    tile_n, d = a.shape
    ones_row = jnp.ones((1, d), dtype=jnp.float32)

    dp2 = (p - a) ** 2                          # (TILE_N, D) on the VPU
    dn2 = (g - a) ** 2

    # ones(1,D) . diffsq(TILE_N,D)^T  ->  (1, TILE_N): the MXU both reduces
    # over the embedding axis and delivers the result lane-dense (rows on the
    # lane axis), so no in-kernel transposes/relayouts are needed.
    dims = (((1,), (1,)), ((), ()))
    dsq_ap = lax.dot_general(ones_row, dp2, dims,
                             precision=lax.Precision.HIGHEST,
                             preferred_element_type=jnp.float32)
    dsq_an = lax.dot_general(ones_row, dn2, dims,
                             precision=lax.Precision.HIGHEST,
                             preferred_element_type=jnp.float32)

    d_ap = jnp.sqrt(dsq_ap + 1e-8)              # (1, TILE_N)
    d_an = jnp.sqrt(dsq_an + 1e-8)

    pos_loss = jnp.maximum(d_ap - beta + margin, 0.0)   # (1, TILE_N)
    neg_loss = jnp.maximum(beta - d_an + margin, 0.0)   # (1, TILE_N)

    # Mask out lanes beyond the true batch size (last tile may read past N;
    # every derived quantity below is gated, so OOB garbage cannot leak).
    lane = lax.broadcasted_iota(jnp.int32, (1, tile_n), 1)
    valid = (i * tile_n + lane) < n_rows

    # torch: (pos_loss > 0) + (neg_loss > 0) on bools == logical OR.
    active = jnp.logical_and(jnp.logical_or(pos_loss > 0.0, neg_loss > 0.0),
                             valid)

    contrib = jnp.where(valid, pos_loss + neg_loss + nu_eff * beta, 0.0)
    tile_loss = jnp.sum(contrib)                        # f32 scalar
    tile_cnt = jnp.sum(jnp.where(active, 1.0, 0.0))     # f32 (cast once later)

    # Per-tile partials into lane-dense (1,1,128) blocks (no cross-iteration
    # state -> the grid axis can be 'parallel').
    loss_ref[...] = jnp.full(loss_ref.shape, tile_loss, dtype=jnp.float32)
    cnt_ref[...] = jnp.full(cnt_ref.shape, tile_cnt, dtype=jnp.float32)


def _choose_tile_n(n, d, itemsize):
    """Largest lane-count tile (multiple of 128, capped at 8192) whose
    double-buffered native-dtype inputs plus in-kernel f32 temporaries stay
    within ~20 MiB (inside the 32 MiB scoped-VMEM limit on all generations,
    including v7x's 64 MiB physical VMEM)."""
    budget = 20 * 1024 * 1024
    # 3 inputs x 2 buffers (native dtype) + ~6 live f32 (TILE_N, D)
    # temporaries (casts / diffs / squares) + beta row (negligible).
    per_row = 3 * 2 * d * itemsize + 6 * d * 4 + 32
    tile = (budget // per_row) // 128 * 128
    tile = max(128, min(8192, int(tile)))
    n_round = int(pl.cdiv(n, 128)) * 128       # don't blow up a tiny batch
    return min(tile, n_round)


def margin_loss(anchors, positives, negatives, beta_in, a_indices=None,
                margin=0.2, nu=0.0, tile_n=None):
    """Pallas implementation of MarginLoss.forward.

    anchors / positives / negatives: (N, D) float arrays (any float dtype).
    beta_in: (num_classes,) used with a_indices, or (N,) per-row beta.
    Returns (loss: f32 scalar, pair_cnt: int32 scalar).
    """
    if a_indices is not None:
        beta = beta_in[a_indices]      # data-dependent gather stays in JAX
        nu_eff = float(nu)
    else:
        beta = beta_in
        nu_eff = 0.0                   # torch: beta_reg_loss == 0.0 here

    N, D = anchors.shape
    itemsize = jnp.dtype(anchors.dtype).itemsize
    if tile_n is None:
        tile_n = _choose_tile_n(N, D, itemsize)
    num_tiles = int(pl.cdiv(N, tile_n))

    # Lane-dense per-row beta (tiny); embeddings go in unmodified.
    beta_row = beta.reshape(1, N).astype(jnp.float32)
    n_smem = jnp.array([N], dtype=jnp.int32)
    par_smem = jnp.array([margin, nu_eff], dtype=jnp.float32)

    grid_spec = pltpu.PrefetchScalarGridSpec(
        num_scalar_prefetch=2,
        grid=(num_tiles,),
        in_specs=[
            pl.BlockSpec((tile_n, D), lambda i, n, par: (i, 0)),   # anchors
            pl.BlockSpec((tile_n, D), lambda i, n, par: (i, 0)),   # positives
            pl.BlockSpec((tile_n, D), lambda i, n, par: (i, 0)),   # negatives
            pl.BlockSpec((1, tile_n), lambda i, n, par: (0, i)),   # beta row
        ],
        out_specs=(
            pl.BlockSpec((1, 1, 128), lambda i, n, par: (i, 0, 0)),  # loss part
            pl.BlockSpec((1, 1, 128), lambda i, n, par: (i, 0, 0)),  # cnt part
        ),
    )

    loss_part, cnt_part = pl.pallas_call(
        _margin_loss_kernel,
        grid_spec=grid_spec,
        out_shape=(
            jax.ShapeDtypeStruct((num_tiles, 1, 128), jnp.float32),
            jax.ShapeDtypeStruct((num_tiles, 1, 128), jnp.float32),
        ),
        compiler_params=pltpu.CompilerParams(
            dimension_semantics=("parallel",),       # no cross-tile state
            vmem_limit_bytes=32 * 1024 * 1024,
        ),
    )(n_smem, par_smem, anchors, positives, negatives, beta_row)

    loss_sum = jnp.sum(loss_part[:, 0, 0])
    pair_cnt_f = jnp.sum(cnt_part[:, 0, 0])
    # NOTE: matches the torch module -- divides by pair_cnt even if it is 0.
    loss = loss_sum / pair_cnt_f
    return loss, pair_cnt_f.astype(jnp.int32)


def _reference(anchors, positives, negatives, beta_in, a_indices=None,
               margin=0.2, nu=0.0):
    """Pure-JAX reference mirroring the PyTorch forward."""
    if a_indices is not None:
        beta = beta_in[a_indices]
        beta_reg_loss = jnp.sum(beta) * nu
    else:
        beta = beta_in
        beta_reg_loss = 0.0
    d_ap = jnp.sqrt(jnp.sum((positives - anchors) ** 2, axis=1) + 1e-8)
    d_an = jnp.sqrt(jnp.sum((negatives - anchors) ** 2, axis=1) + 1e-8)
    pos_loss = jnp.maximum(d_ap - beta + margin, 0.0)
    neg_loss = jnp.maximum(beta - d_an + margin, 0.0)
    pair_cnt = jnp.sum(jnp.logical_or(pos_loss > 0.0, neg_loss > 0.0))
    loss = (jnp.sum(pos_loss + neg_loss) + beta_reg_loss) / pair_cnt
    return loss, pair_cnt


if __name__ == "__main__":
    key = jax.random.PRNGKey(0)
    keys = jax.random.split(key, 10)

    margin, nu = 0.2, 0.1

    # --- Test 1 & 2: small batch (N=8, D=32), both beta paths, partial tile.
    N, D = 8, 32
    num_classes = 16
    anchors = jax.random.normal(keys[0], (N, D), dtype=jnp.float32)
    positives = jax.random.normal(keys[1], (N, D), dtype=jnp.float32)
    negatives = jax.random.normal(keys[2], (N, D), dtype=jnp.float32)
    beta_in = 1.0 + 0.1 * jax.random.normal(keys[3], (num_classes,),
                                            dtype=jnp.float32)
    a_indices = jax.random.randint(keys[4], (N,), 0, num_classes)

    loss1, cnt1 = margin_loss(anchors, positives, negatives, beta_in,
                              a_indices=a_indices, margin=margin, nu=nu)
    ref_loss1, ref_cnt1 = _reference(anchors, positives, negatives, beta_in,
                                     a_indices=a_indices, margin=margin, nu=nu)

    beta_rows = beta_in[a_indices]
    loss2, cnt2 = margin_loss(anchors, positives, negatives, beta_rows,
                              a_indices=None, margin=margin, nu=nu)
    ref_loss2, ref_cnt2 = _reference(anchors, positives, negatives, beta_rows,
                                     a_indices=None, margin=margin, nu=nu)

    # --- Test 3: multi-tile 'parallel' path with a partial last tile
    #             (N=300, TILE_N forced to 128 -> 3 tiles, 44 masked rows).
    N3, D3 = 300, 64
    a3 = jax.random.normal(keys[5], (N3, D3), dtype=jnp.float32)
    p3 = jax.random.normal(keys[6], (N3, D3), dtype=jnp.float32)
    n3 = jax.random.normal(keys[7], (N3, D3), dtype=jnp.float32)
    b3 = 1.0 + 0.1 * jax.random.normal(keys[8], (num_classes,),
                                       dtype=jnp.float32)
    idx3 = jax.random.randint(keys[9], (N3,), 0, num_classes)

    loss3, cnt3 = margin_loss(a3, p3, n3, b3, a_indices=idx3,
                              margin=margin, nu=nu, tile_n=128)
    ref_loss3, ref_cnt3 = _reference(a3, p3, n3, b3, a_indices=idx3,
                                     margin=margin, nu=nu)

    jax.block_until_ready((loss1, cnt1, loss2, cnt2, loss3, cnt3))

    assert int(cnt1) == int(ref_cnt1), (int(cnt1), int(ref_cnt1))
    assert int(cnt2) == int(ref_cnt2), (int(cnt2), int(ref_cnt2))
    assert int(cnt3) == int(ref_cnt3), (int(cnt3), int(ref_cnt3))
    assert abs(float(loss1) - float(ref_loss1)) < 5e-5, (float(loss1), float(ref_loss1))
    assert abs(float(loss2) - float(ref_loss2)) < 5e-5, (float(loss2), float(ref_loss2))
    assert abs(float(loss3) - float(ref_loss3)) < 2e-4, (float(loss3), float(ref_loss3))

    print("KERNEL_OK")
</pallas_src>

<mosaic_0001>
module attributes {stable_mosaic.version = 11 : i64} {
  func.func @_margin_loss_kernel(%arg0: i32, %arg1: memref<1xi32, #tpu.memory_space<smem>>, %arg2: memref<2xf32, #tpu.memory_space<smem>>, %arg3: memref<128x32xf32, #tpu.memory_space<vmem>>, %arg4: memref<128x32xf32, #tpu.memory_space<vmem>>, %arg5: memref<128x32xf32, #tpu.memory_space<vmem>>, %arg6: memref<1x128xf32, #tpu.memory_space<vmem>>, %arg7: memref<1x1x128xf32, #tpu.memory_space<vmem>>, %arg8: memref<1x1x128xf32, #tpu.memory_space<vmem>>) attributes {dimension_semantics = [#tpu.dimension_semantics<parallel>], iteration_bounds = array<i64: 1>, scalar_prefetch = 2 : i64, scratch_operands = 0 : i64, tpu.core_type = #tpu.core_type<tc>, window_params = [{transform_indices = @transform_0, window_bounds = array<i64: 128, 32>}, {transform_indices = @transform_1, window_bounds = array<i64: 128, 32>}, {transform_indices = @transform_2, window_bounds = array<i64: 128, 32>}, {transform_indices = @transform_3, window_bounds = array<i64: 1, 128>}, {transform_indices = @transform_4, window_bounds = array<i64: 1, 1, 128>}, {transform_indices = @transform_5, window_bounds = array<i64: 1, 1, 128>}]} {
    %c0 = arith.constant 0 : index
    %0 = memref.load %arg2[%c0] : memref<2xf32, #tpu.memory_space<smem>>
    %c1 = arith.constant 1 : index
    %1 = memref.load %arg2[%c1] : memref<2xf32, #tpu.memory_space<smem>>
    %c0_0 = arith.constant 0 : index
    %2 = memref.load %arg1[%c0_0] : memref<1xi32, #tpu.memory_space<smem>>
    %c0_1 = arith.constant 0 : index
    %c0_2 = arith.constant 0 : index
    %3 = vector.load %arg3[%c0_1, %c0_2] : memref<128x32xf32, #tpu.memory_space<vmem>>, vector<128x32xf32>
    %c0_3 = arith.constant 0 : index
    %c0_4 = arith.constant 0 : index
    %4 = vector.load %arg4[%c0_3, %c0_4] : memref<128x32xf32, #tpu.memory_space<vmem>>, vector<128x32xf32>
    %c0_5 = arith.constant 0 : index
    %c0_6 = arith.constant 0 : index
    %5 = vector.load %arg5[%c0_5, %c0_6] : memref<128x32xf32, #tpu.memory_space<vmem>>, vector<128x32xf32>
    %c0_7 = arith.constant 0 : index
    %c0_8 = arith.constant 0 : index
    %6 = vector.load %arg6[%c0_7, %c0_8] : memref<1x128xf32, #tpu.memory_space<vmem>>, vector<1x128xf32>
    %cst = arith.constant 1.000000e+00 : f32
    %7 = vector.broadcast %cst : f32 to vector<1x32xf32>
    %8 = arith.subf %4, %3 : vector<128x32xf32>
    %9 = arith.mulf %8, %8 : vector<128x32xf32>
    %10 = arith.subf %5, %3 : vector<128x32xf32>
    %11 = arith.mulf %10, %10 : vector<128x32xf32>
    %cst_9 = arith.constant dense<0.000000e+00> : vector<1x128xf32>
    %12 = tpu.matmul %7, %9, %cst_9 {dimension_numbers = #tpu.dot_dimension_numbers<[1], [1], [0], [0], [0, 0, 1, 0], [], []>, precision = #tpu.contract_precision<fp32>} : vector<1x32xf32>, vector<128x32xf32>, vector<1x128xf32> -> vector<1x128xf32>
    %cst_10 = arith.constant dense<0.000000e+00> : vector<1x128xf32>
    %13 = tpu.matmul %7, %11, %cst_10 {dimension_numbers = #tpu.dot_dimension_numbers<[1], [1], [0], [0], [0, 0, 1, 0], [], []>, precision = #tpu.contract_precision<fp32>} : vector<1x32xf32>, vector<128x32xf32>, vector<1x128xf32> -> vector<1x128xf32>
    %cst_11 = arith.constant 9.99999993E-9 : f32
    %14 = vector.broadcast %cst_11 : f32 to vector<1x128xf32>
    %15 = arith.addf %12, %14 : vector<1x128xf32>
    %16 = math.sqrt %15 : vector<1x128xf32>
    %cst_12 = arith.constant 9.99999993E-9 : f32
    %17 = vector.broadcast %cst_12 : f32 to vector<1x128xf32>
    %18 = arith.addf %13, %17 : vector<1x128xf32>
    %19 = math.sqrt %18 : vector<1x128xf32>
    %20 = arith.subf %16, %6 : vector<1x128xf32>
    %21 = vector.broadcast %0 : f32 to vector<1x128xf32>
    %22 = arith.addf %20, %21 : vector<1x128xf32>
    %cst_13 = arith.constant 0.000000e+00 : f32
    %23 = vector.broadcast %cst_13 : f32 to vector<1x128xf32>
    %24 = arith.maximumf %22, %23 : vector<1x128xf32>
    %25 = arith.subf %6, %19 : vector<1x128xf32>
    %26 = vector.broadcast %0 : f32 to vector<1x128xf32>
    %27 = arith.addf %25, %26 : vector<1x128xf32>
    %cst_14 = arith.constant 0.000000e+00 : f32
    %28 = vector.broadcast %cst_14 : f32 to vector<1x128xf32>
    %29 = arith.maximumf %27, %28 : vector<1x128xf32>
    %30 = tpu.iota {dimensions = array<i32: 1>} : vector<1x128xi32>
    %c128_i32 = arith.constant 128 : i32
    %31 = arith.muli %arg0, %c128_i32 : i32
    %32 = vector.broadcast %31 : i32 to vector<1x128xi32>
    %33 = arith.addi %32, %30 : vector<1x128xi32>
    %34 = vector.broadcast %2 : i32 to vector<1x128xi32>
    %35 = arith.cmpi slt, %33, %34 : vector<1x128xi32>
    %cst_15 = arith.constant 0.000000e+00 : f32
    %36 = vector.broadcast %cst_15 : f32 to vector<1x128xf32>
    %37 = arith.cmpf ogt, %24, %36 : vector<1x128xf32>
    %cst_16 = arith.constant 0.000000e+00 : f32
    %38 = vector.broadcast %cst_16 : f32 to vector<1x128xf32>
    %39 = arith.cmpf ogt, %29, %38 : vector<1x128xf32>
    %40 = arith.ori %37, %39 : vector<1x128xi1>
    %41 = arith.andi %40, %35 : vector<1x128xi1>
    %42 = arith.addf %24, %29 : vector<1x128xf32>
    %43 = vector.broadcast %1 : f32 to vector<1x128xf32>
    %44 = arith.mulf %43, %6 : vector<1x128xf32>
    %45 = arith.addf %42, %44 : vector<1x128xf32>
    %cst_17 = arith.constant 0.000000e+00 : f32
    %46 = vector.broadcast %cst_17 : f32 to vector<1x128xf32>
    %47 = arith.select %35, %45, %46 : vector<1x128xi1>, vector<1x128xf32>
    %48 = vector.shape_cast %47 : vector<1x128xf32> to vector<1x1x128xf32>
    %cst_18 = arith.constant dense<0.000000e+00> : vector<1xf32>
    %49 = vector.multi_reduction <add>, %48, %cst_18 [1, 2] : vector<1x1x128xf32> to vector<1xf32>
    %50 = vector.shape_cast %49 : vector<1xf32> to vector<1x1x1xf32>
    %51 = vector.extract %50[0, 0, 0] : f32 from vector<1x1x1xf32>
    %cst_19 = arith.constant 1.000000e+00 : f32
    %cst_20 = arith.constant 0.000000e+00 : f32
    %52 = vector.broadcast %cst_19 : f32 to vector<1x128xf32>
    %53 = vector.broadcast %cst_20 : f32 to vector<1x128xf32>
    %54 = arith.select %41, %52, %53 : vector<1x128xi1>, vector<1x128xf32>
    %55 = vector.shape_cast %54 : vector<1x128xf32> to vector<1x1x128xf32>
    %cst_21 = arith.constant dense<0.000000e+00> : vector<1xf32>
    %56 = vector.multi_reduction <add>, %55, %cst_21 [1, 2] : vector<1x1x128xf32> to vector<1xf32>
    %57 = vector.shape_cast %56 : vector<1xf32> to vector<1x1x1xf32>
    %58 = vector.extract %57[0, 0, 0] : f32 from vector<1x1x1xf32>
    %59 = vector.broadcast %51 : f32 to vector<1x1x128xf32>
    %c0_22 = arith.constant 0 : index
    %c0_23 = arith.constant 0 : index
    %c0_24 = arith.constant 0 : index
    %60 = vector.load %arg7[%c0_22, %c0_23, %c0_24] : memref<1x1x128xf32, #tpu.memory_space<vmem>>, vector<1x1x128xf32>
    tpu.vector_store %arg7[%c0_22, %c0_23, %c0_24], %59 {strides = array<i32>} : memref<1x1x128xf32, #tpu.memory_space<vmem>>, vector<1x1x128xf32>,
    %61 = vector.broadcast %58 : f32 to vector<1x1x128xf32>
    %c0_25 = arith.constant 0 : index
    %c0_26 = arith.constant 0 : index
    %c0_27 = arith.constant 0 : index
    %62 = vector.load %arg8[%c0_25, %c0_26, %c0_27] : memref<1x1x128xf32, #tpu.memory_space<vmem>>, vector<1x1x128xf32>
    tpu.vector_store %arg8[%c0_25, %c0_26, %c0_27], %61 {strides = array<i32>} : memref<1x1x128xf32, #tpu.memory_space<vmem>>, vector<1x1x128xf32>,
    return
  }
  func.func @transform_0(%arg0: i32, %arg1: memref<1xi32, #tpu.memory_space<smem>>, %arg2: memref<2xf32, #tpu.memory_space<smem>>) -> (i32, i32) {
    %c0_i32 = arith.constant 0 : i32
    %c0_i32_0 = arith.constant 0 : i32
    return %arg0, %c0_i32 : i32, i32
  }
  func.func @transform_1(%arg0: i32, %arg1: memref<1xi32, #tpu.memory_space<smem>>, %arg2: memref<2xf32, #tpu.memory_space<smem>>) -> (i32, i32) {
    %c0_i32 = arith.constant 0 : i32
    %c0_i32_0 = arith.constant 0 : i32
    return %arg0, %c0_i32 : i32, i32
  }
  func.func @transform_2(%arg0: i32, %arg1: memref<1xi32, #tpu.memory_space<smem>>, %arg2: memref<2xf32, #tpu.memory_space<smem>>) -> (i32, i32) {
    %c0_i32 = arith.constant 0 : i32
    %c0_i32_0 = arith.constant 0 : i32
    return %arg0, %c0_i32 : i32, i32
  }
  func.func @transform_3(%arg0: i32, %arg1: memref<1xi32, #tpu.memory_space<smem>>, %arg2: memref<2xf32, #tpu.memory_space<smem>>) -> (i32, i32) {
    %c0_i32 = arith.constant 0 : i32
    %c0_i32_0 = arith.constant 0 : i32
    return %c0_i32, %arg0 : i32, i32
  }
  func.func @transform_4(%arg0: i32, %arg1: memref<1xi32, #tpu.memory_space<smem>>, %arg2: memref<2xf32, #tpu.memory_space<smem>>) -> (i32, i32, i32) {
    %c0_i32 = arith.constant 0 : i32
    %c0_i32_0 = arith.constant 0 : i32
    %c0_i32_1 = arith.constant 0 : i32
    return %arg0, %c0_i32, %c0_i32_0 : i32, i32, i32
  }
  func.func @transform_5(%arg0: i32, %arg1: memref<1xi32, #tpu.memory_space<smem>>, %arg2: memref<2xf32, #tpu.memory_space<smem>>) -> (i32, i32, i32) {
    %c0_i32 = arith.constant 0 : i32
    %c0_i32_0 = arith.constant 0 : i32
    %c0_i32_1 = arith.constant 0 : i32
    return %arg0, %c0_i32, %c0_i32_0 : i32, i32, i32
  }
}

</mosaic_0001>

<llo_original>
// kernel: tpu_custom_call.1
$region0: #{tpu_custom_call.1}
  #allocation0 [shape = 'u32[]', space=smem, size = 0x4, offset = 0x4, fixed_abs, tag = 'smem constant byte address 0x4 - core index']
  #allocation1 [shape = 'u32[144,128]{1,0:T(1,128)}', space=vmem, size = 0x12000, scoped, tag = 'internal scratch']
  #allocation2 [shape = 's32[1]{0}', space=sflag, size = 0x4, scoped, tag = 'scoped memory for tpu_custom_call.1']
  #allocation3 [shape = 's32[1]{0:T(128)S(6)}', space=smem, size = 0x200, scoped, tag = 'prefetched SMEM operand 0']
  #allocation4 [shape = 'u8[512]{0}', space=smem, size = 0x200, scoped, tag = 'prefetched SMEM operand 1']
  %s0 = inlined_call_operand.<no memory space> [shape: s32[1], index: 0, kind: input, shape index: {}]
  %s1 = inlined_call_operand.vmem [shape: f32[2], index: 1, kind: input, shape index: {}]
  %s2 = inlined_call_operand.hbm [shape: f32[8,32], index: 2, kind: input, shape index: {}]
  %s3 = inlined_call_operand.vmem [shape: f32[8,32], index: 3, kind: input, shape index: {}]
  %s4 = inlined_call_operand.hbm [shape: f32[8,32], index: 4, kind: input, shape index: {}]
  %s5 = inlined_call_operand.vmem [shape: f32[1,8], index: 5, kind: input, shape index: {}]
  %s6 = inlined_call_operand.hbm [shape: f32[1,1,128], index: 6, kind: output, shape index: {0}]
  %s7 = inlined_call_operand.hbm [shape: f32[1,1,128], index: 7, kind: output, shape index: {1}]
  %8 = xla_tuple %s6, %s7
  %s9 = sld [smem:[#allocation0]]
  $region42: #{tpu_custom_call.1} parent=0
    _
  %s11 = ssub.s32 1, %s9
  %s12 = scalar_select 0, %s11, %s9
  %13 = sst [smem:[#allocation3]] %s0
  %s14 = sshll.u32 %s1, 4
  %s15 = int_to_ptr.vmem [resolvable:$true] %s14
  %17 = dma.vmem_to_smem %s15, 16, [#allocation4], [#allocation2]
  %18 = dma.done [#allocation2], 16
  %19 = sfence
  $region1: #{tpu_custom_call.1} parent=0
    #allocation5 [shape = 'u8[65536]{0}', space=vmem, size = 0x10000, scoped, tag = 'input window, operand 2, single buffered']
    #allocation6 [shape = 's32[1]{0}', space=sflag, size = 0x4, scoped, tag = 'scoped memory for tpu_custom_call.1']
    #allocation7 [shape = 's32[1]{0}', space=sflag, size = 0x4, scoped, tag = 'scoped memory for tpu_custom_call.1']
    #allocation8 [shape = 'u8[65536]{0}', space=vmem, size = 0x10000, scoped, tag = 'input window, operand 4, single buffered']
    #allocation9 [shape = 's32[1]{0}', space=sflag, size = 0x4, scoped, tag = 'scoped memory for tpu_custom_call.1']
    #allocation10 [shape = 'u8[512]{0}', space=vmem, size = 0x400, scoped, tag = 'output window, operand 0, single buffered']
    #allocation11 [shape = 'u8[512]{0}', space=vmem, size = 0x400, scoped, tag = 'output window, operand 1, single buffered']
    #allocation12 [shape = 's32[1]{0}', space=sflag, size = 0x4, scoped, tag = 'scoped memory for tpu_custom_call.1']
    %20 = vsyncpa [#allocation6], 0
    %21 = vsyncpa [#allocation9], 0
    %22 = vsyncpa [#allocation7], 0
    %23 = vsyncpa [#allocation12], 0
    // Predicated region
    $region2: #{tpu_custom_call.1} parent=1 // pred_check
      _
    $region3: #{tpu_custom_call.1} parent=1 // pred_check_branch
      %25 = sbr.rel (0) target = $region5
    $region4: #{tpu_custom_call.1} parent=1 // pred_region
      %s27 = ssub.s32 2048, 128
      %28 = vsyncadd [#allocation6], %s27
      %s29 = sshll.u32 [#allocation5], 4
      %s30 = int_to_ptr.vmem [resolvable:$true] %s29
      %35 = dma.hbm_to_vmem [thread:$0]  %s2, 128, %s30, [#allocation6], 128, 128, 8
    $region5: #{tpu_custom_call.1} parent=1 // pred_fallthru
      _
    // Predicated region
    $region6: #{tpu_custom_call.1} parent=1 // pred_check
      _
    $region7: #{tpu_custom_call.1} parent=1 // pred_check_branch
      %37 = sbr.rel (0) target = $region9
    $region8: #{tpu_custom_call.1} parent=1 // pred_region
      _
    $region9: #{tpu_custom_call.1} parent=1 // pred_fallthru
      _
    // Predicated region
    $region10: #{tpu_custom_call.1} parent=1 // pred_check
      _
    $region11: #{tpu_custom_call.1} parent=1 // pred_check_branch
      %39 = sbr.rel (0) target = $region13
    $region12: #{tpu_custom_call.1} parent=1 // pred_region
      %s41 = ssub.s32 2048, 128
      %42 = vsyncadd [#allocation9], %s41
      %s43 = sshll.u32 [#allocation8], 4
      %s44 = int_to_ptr.vmem [resolvable:$true] %s43
      %49 = dma.hbm_to_vmem [thread:$0]  %s4, 128, %s44, [#allocation9], 128, 128, 8
    $region13: #{tpu_custom_call.1} parent=1 // pred_fallthru
      _
    // Predicated region
    $region14: #{tpu_custom_call.1} parent=1 // pred_check
      _
    $region15: #{tpu_custom_call.1} parent=1 // pred_check_branch
      %51 = sbr.rel (0) target = $region17
    $region16: #{tpu_custom_call.1} parent=1 // pred_region
      _
    $region17: #{tpu_custom_call.1} parent=1 // pred_fallthru
      _
    // Predicated region
    $region18: #{tpu_custom_call.1} parent=1 // pred_check
      _
    $region19: #{tpu_custom_call.1} parent=1 // pred_check_branch
      %53 = sbr.rel (0) target = $region21
    $region20: #{tpu_custom_call.1} parent=1 // pred_region
      %54 = dma.done [#allocation6], 2048
    $region21: #{tpu_custom_call.1} parent=1 // pred_fallthru
      _
    // Predicated region
    $region22: #{tpu_custom_call.1} parent=1 // pred_check
      _
    $region23: #{tpu_custom_call.1} parent=1 // pred_check_branch
      %56 = sbr.rel (0) target = $region25
    $region24: #{tpu_custom_call.1} parent=1 // pred_region
      %57 = dma.done [#allocation9], 2048
    $region25: #{tpu_custom_call.1} parent=1 // pred_fallthru
      _
    %s58 = sld [smem:[#allocation4]]
    %s59 = sld [smem:[#allocation4 + $0x1]]
    %s60 = sld [smem:[#allocation3]]
    %v61 = vld [vmem:[#allocation5] sm:$0xff]
    %v62 = vld [vmem:[#allocation5 + $0x8] sm:$0xff]
    %v63 = vld [vmem:[#allocation5 + $0x10] sm:$0xff]
    %v64 = vld [vmem:[#allocation5 + $0x18] sm:$0xff]
    %v65 = vld [vmem:[#allocation5 + $0x20] sm:$0xff]
    %v66 = vld [vmem:[#allocation5 + $0x28] sm:$0xff]
    %v67 = vld [vmem:[#allocation5 + $0x30] sm:$0xff]
    %v68 = vld [vmem:[#allocation5 + $0x38] sm:$0xff]
    %v69 = vld [vmem:[#allocation5 + $0x40] sm:$0xff]
    %v70 = vld [vmem:[#allocation5 + $0x48] sm:$0xff]
    %v71 = vld [vmem:[#allocation5 + $0x50] sm:$0xff]
    %v72 = vld [vmem:[#allocation5 + $0x58] sm:$0xff]
    %v73 = vld [vmem:[#allocation5 + $0x60] sm:$0xff]
    %v74 = vld [vmem:[#allocation5 + $0x68] sm:$0xff]
    %v75 = vld [vmem:[#allocation5 + $0x70] sm:$0xff]
    %v76 = vld [vmem:[#allocation5 + $0x78] sm:$0xff]
    %v77 = vld [vmem:[%s3] sm:$0xff]
    %v78 = vld [vmem:[%s3 + $0x8] sm:$0xff]
    %v79 = vld [vmem:[%s3 + $0x10] sm:$0xff]
    %v80 = vld [vmem:[%s3 + $0x18] sm:$0xff]
    %v81 = vld [vmem:[%s3 + $0x20] sm:$0xff]
    %v82 = vld [vmem:[%s3 + $0x28] sm:$0xff]
    %v83 = vld [vmem:[%s3 + $0x30] sm:$0xff]
    %v84 = vld [vmem:[%s3 + $0x38] sm:$0xff]
    %v85 = vld [vmem:[%s3 + $0x40] sm:$0xff]
    %v86 = vld [vmem:[%s3 + $0x48] sm:$0xff]
    %v87 = vld [vmem:[%s3 + $0x50] sm:$0xff]
    %v88 = vld [vmem:[%s3 + $0x58] sm:$0xff]
    %v89 = vld [vmem:[%s3 + $0x60] sm:$0xff]
    %v90 = vld [vmem:[%s3 + $0x68] sm:$0xff]
    %v91 = vld [vmem:[%s3 + $0x70] sm:$0xff]
    %v92 = vld [vmem:[%s3 + $0x78] sm:$0xff]
    %v93 = vld [vmem:[#allocation8] sm:$0xff]
    %v94 = vld [vmem:[#allocation8 + $0x8] sm:$0xff]
    %v95 = vld [vmem:[#allocation8 + $0x10] sm:$0xff]
    %v96 = vld [vmem:[#allocation8 + $0x18] sm:$0xff]
    %v97 = vld [vmem:[#allocation8 + $0x20] sm:$0xff]
    %v98 = vld [vmem:[#allocation8 + $0x28] sm:$0xff]
    %v99 = vld [vmem:[#allocation8 + $0x30] sm:$0xff]
    %v100 = vld [vmem:[#allocation8 + $0x38] sm:$0xff]
    %v101 = vld [vmem:[#allocation8 + $0x40] sm:$0xff]
    %v102 = vld [vmem:[#allocation8 + $0x48] sm:$0xff]
    %v103 = vld [vmem:[#allocation8 + $0x50] sm:$0xff]
    %v104 = vld [vmem:[#allocation8 + $0x58] sm:$0xff]
    %v105 = vld [vmem:[#allocation8 + $0x60] sm:$0xff]
    %v106 = vld [vmem:[#allocation8 + $0x68] sm:$0xff]
    %v107 = vld [vmem:[#allocation8 + $0x70] sm:$0xff]
    %v108 = vld [vmem:[#allocation8 + $0x78] sm:$0xff]
    %v109 = vld [vmem:[%s5] sm:$0x1]
    %v110 = vsub.f32 %v77, %v61
    %v111 = vsub.f32 %v78, %v62
    %v112 = vsub.f32 %v79, %v63
    %v113 = vsub.f32 %v80, %v64
    %v114 = vsub.f32 %v81, %v65
    %v115 = vsub.f32 %v82, %v66
    %v116 = vsub.f32 %v83, %v67
    %v117 = vsub.f32 %v84, %v68
    %v118 = vsub.f32 %v85, %v69
    %v119 = vsub.f32 %v86, %v70
    %v120 = vsub.f32 %v87, %v71
    %v121 = vsub.f32 %v88, %v72
    %v122 = vsub.f32 %v89, %v73
    %v123 = vsub.f32 %v90, %v74
    %v124 = vsub.f32 %v91, %v75
    %v125 = vsub.f32 %v92, %v76
    %v126 = vmul.f32 %v110, %v110
    %v127 = vmul.f32 %v111, %v111
    %v128 = vmul.f32 %v112, %v112
    %v129 = vmul.f32 %v113, %v113
    %v130 = vmul.f32 %v114, %v114
    %v131 = vmul.f32 %v115, %v115
    %v132 = vmul.f32 %v116, %v116
    %v133 = vmul.f32 %v117, %v117
    %v134 = vmul.f32 %v118, %v118
    %v135 = vmul.f32 %v119, %v119
    %v136 = vmul.f32 %v120, %v120
    %v137 = vmul.f32 %v121, %v121
    %v138 = vmul.f32 %v122, %v122
    %v139 = vmul.f32 %v123, %v123
    %v140 = vmul.f32 %v124, %v124
    %v141 = vmul.f32 %v125, %v125
    %v142 = vsub.f32 %v93, %v61
    %v143 = vsub.f32 %v94, %v62
    %v144 = vsub.f32 %v95, %v63
    %v145 = vsub.f32 %v96, %v64
    %v146 = vsub.f32 %v97, %v65
    %v147 = vsub.f32 %v98, %v66
    %v148 = vsub.f32 %v99, %v67
    %v149 = vsub.f32 %v100, %v68
    %v150 = vsub.f32 %v101, %v69
    %v151 = vsub.f32 %v102, %v70
    %v152 = vsub.f32 %v103, %v71
    %v153 = vsub.f32 %v104, %v72
    %v154 = vsub.f32 %v105, %v73
    %v155 = vsub.f32 %v106, %v74
    %v156 = vsub.f32 %v107, %v75
    %v157 = vsub.f32 %v108, %v76
    %v158 = vmul.f32 %v142, %v142
    %v159 = vmul.f32 %v143, %v143
    %v160 = vmul.f32 %v144, %v144
    %v161 = vmul.f32 %v145, %v145
    %v162 = vmul.f32 %v146, %v146
    %v163 = vmul.f32 %v147, %v147
    %v164 = vmul.f32 %v148, %v148
    %v165 = vmul.f32 %v149, %v149
    %v166 = vmul.f32 %v150, %v150
    %v167 = vmul.f32 %v151, %v151
    %v168 = vmul.f32 %v152, %v152
    %v169 = vmul.f32 %v153, %v153
    %v170 = vmul.f32 %v154, %v154
    %v171 = vmul.f32 %v155, %v155
    %v172 = vmul.f32 %v156, %v156
    %v173 = vmul.f32 %v157, %v157
    %vm174 = vcmask 261120
    %v176 = vsel %vm174, 1.0, 0
    %v179 = vsel %vm174, %v126, 0
    %v182 = vsel %vm174, %v127, 0
    %v185 = vsel %vm174, %v128, 0
    %v188 = vsel %vm174, %v129, 0
    %v191 = vsel %vm174, %v130, 0
    %v194 = vsel %vm174, %v131, 0
    %v197 = vsel %vm174, %v132, 0
    %v200 = vsel %vm174, %v133, 0
    %v203 = vsel %vm174, %v134, 0
    %v206 = vsel %vm174, %v135, 0
    %v209 = vsel %vm174, %v136, 0
    %v212 = vsel %vm174, %v137, 0
    %v215 = vsel %vm174, %v138, 0
    %v218 = vsel %vm174, %v139, 0
    %v221 = vsel %vm174, %v140, 0
    %v224 = vsel %vm174, %v141, 0
    %226 = vmatprep.subr.mxu0 0.0
    %v227 = vand.u32 %v179, 4294901760
    %228 = vmatpush1.xpose.msra.mxu0 %v227
    %229 = vmatprep.subr.mxu0 0.0
    %v230 = vand.u32 %v182, 4294901760
    %231 = vmatpush1.xpose.msra.mxu0 %v230
    %232 = vmatprep.subr.mxu0 0.0
    %v233 = vand.u32 %v185, 4294901760
    %234 = vmatpush1.xpose.msra.mxu0 %v233
    %235 = vmatprep.subr.mxu0 0.0
    %v236 = vand.u32 %v188, 4294901760
    %237 = vmatpush1.xpose.msra.mxu0 %v236
    %238 = vmatprep.subr.mxu0 0.0
    %v239 = vand.u32 %v191, 4294901760
    %240 = vmatpush1.xpose.msra.mxu0 %v239
    %241 = vmatprep.subr.mxu0 0.0
    %v242 = vand.u32 %v194, 4294901760
    %243 = vmatpush1.xpose.msra.mxu0 %v242
    %244 = vmatprep.subr.mxu0 0.0
    %v245 = vand.u32 %v197, 4294901760
    %246 = vmatpush1.xpose.msra.mxu0 %v245
    %247 = vmatprep.subr.mxu0 0.0
    %v248 = vand.u32 %v200, 4294901760
    %249 = vmatpush1.xpose.msra.mxu0 %v248
    %250 = vmatprep.subr.mxu0 0.0
    %v251 = vand.u32 %v203, 4294901760
    %252 = vmatpush1.xpose.msra.mxu0 %v251
    %253 = vmatprep.subr.mxu0 0.0
    %v254 = vand.u32 %v206, 4294901760
    %255 = vmatpush1.xpose.msra.mxu0 %v254
    %256 = vmatprep.subr.mxu0 0.0
    %v257 = vand.u32 %v209, 4294901760
    %258 = vmatpush1.xpose.msra.mxu0 %v257
    %259 = vmatprep.subr.mxu0 0.0
    %v260 = vand.u32 %v212, 4294901760
    %261 = vmatpush1.xpose.msra.mxu0 %v260
    %262 = vmatprep.subr.mxu0 0.0
    %v263 = vand.u32 %v215, 4294901760
    %264 = vmatpush1.xpose.msra.mxu0 %v263
    %265 = vmatprep.subr.mxu0 0.0
    %v266 = vand.u32 %v218, 4294901760
    %267 = vmatpush1.xpose.msra.mxu0 %v266
    %268 = vmatprep.subr.mxu0 0.0
    %v269 = vand.u32 %v221, 4294901760
    %270 = vmatpush1.xpose.msra.mxu0 %v269
    %271 = vmatprep.subr.mxu0 0.0
    %v272 = vand.u32 %v224, 4294901760
    %273 = vmatpush1.xpose.msra.mxu0 %v272
    %274 = vmatprep.subr.mxu0 0.0
    %275 = vmatpush1.xpose.msra.mxu0 0.0
    %276 = vmatprep.subr.mxu0 0.0
    %277 = vmatpush1.xpose.msra.mxu0 0.0
    %278 = vmatprep.subr.mxu0 0.0
    %279 = vmatpush1.xpose.msra.mxu0 0.0
    %280 = vmatprep.subr.mxu0 0.0
    %281 = vmatpush1.xpose.msra.mxu0 0.0
    %282 = vmatprep.subr.mxu0 0.0
    %283 = vmatpush1.xpose.msra.mxu0 0.0
    %284 = vmatprep.subr.mxu0 0.0
    %285 = vmatpush1.xpose.msra.mxu0 0.0
    %286 = vmatprep.subr.mxu0 0.0
    %287 = vmatpush1.xpose.msra.mxu0 0.0
    %288 = vmatprep.subr.mxu0 0.0
    %289 = vmatpush1.xpose.msra.mxu0 0.0
    %290 = vmatprep.subr.mxu0 0.0
    %291 = vmatpush1.xpose.msra.mxu0 0.0
    %292 = vmatprep.subr.mxu0 0.0
    %293 = vmatpush1.xpose.msra.mxu0 0.0
    %294 = vmatprep.subr.mxu0 0.0
    %295 = vmatpush1.xpose.msra.mxu0 0.0
    %296 = vmatprep.subr.mxu0 0.0
    %297 = vmatpush1.xpose.msra.mxu0 0.0
    %298 = vmatprep.subr.mxu0 0.0
    %299 = vmatpush1.xpose.msra.mxu0 0.0
    %300 = vmatprep.subr.mxu0 0.0
    %301 = vmatpush1.xpose.msra.mxu0 0.0
    %302 = vmatprep.subr.mxu0 0.0
    %303 = vmatpush1.xpose.msra.mxu0 0.0
    %304 = vmatprep.subr.mxu0 0.0
    %305 = vmatpush1.xpose.msra.mxu0 0.0
    %306 = vmatprep.mubr.f32.mxu0 0.0
    %v307 = vand.u32 %v176, 4294901760
    %v308 = vsub.f32 %v176, %v307
    %v309 = vand.u32 %v308, 4294901760
    %v310 = vsub.f32 %v308, %v309
    %v311 = vand.u32 %v310, 4294901760
    %312 = vmatmul.mubr.f32.gmra.mrb[0].mxu0 %v311
    %v313 = vpop.f32.mrb[0].mxu0
    %v314 = vadd.f32 1e-08, %v313
    %v315 = vpop.f32.mrb[0].mxu0
    %316 = vdwg.mxu0
    %317 = vmatprep.subr.mxu0 0.0
    %v318 = vand.u32 %v179, 4294901760
    %v319 = vsub.f32 %v179, %v318
    %v320 = vand.u32 %v319, 4294901760
    %v321 = vsub.f32 %v319, %v320
    %v322 = vand.u32 %v321, 4294901760
    %323 = vmatpush1.xpose.msra.mxu0 %v322
    %324 = vmatprep.subr.mxu0 0.0
    %v325 = vand.u32 %v182, 4294901760
    %v326 = vsub.f32 %v182, %v325
    %v327 = vand.u32 %v326, 4294901760
    %v328 = vsub.f32 %v326, %v327
    %v329 = vand.u32 %v328, 4294901760
    %330 = vmatpush1.xpose.msra.mxu0 %v329
    %331 = vmatprep.subr.mxu0 0.0
    %v332 = vand.u32 %v185, 4294901760
    %v333 = vsub.f32 %v185, %v332
    %v334 = vand.u32 %v333, 4294901760
    %v335 = vsub.f32 %v333, %v334
    %v336 = vand.u32 %v335, 4294901760
    %337 = vmatpush1.xpose.msra.mxu0 %v336
    %338 = vmatprep.subr.mxu0 0.0
    %v339 = vand.u32 %v188, 4294901760
    %v340 = vsub.f32 %v188, %v339
    %v341 = vand.u32 %v340, 4294901760
    %v342 = vsub.f32 %v340, %v341
    %v343 = vand.u32 %v342, 4294901760
    %344 = vmatpush1.xpose.msra.mxu0 %v343
    %345 = vmatprep.subr.mxu0 0.0
    %v346 = vand.u32 %v191, 4294901760
    %v347 = vsub.f32 %v191, %v346
    %v348 = vand.u32 %v347, 4294901760
    %v349 = vsub.f32 %v347, %v348
    %v350 = vand.u32 %v349, 4294901760
    %351 = vmatpush1.xpose.msra.mxu0 %v350
    %352 = vmatprep.subr.mxu0 0.0
    %v353 = vand.u32 %v194, 4294901760
    %v354 = vsub.f32 %v194, %v353
    %v355 = vand.u32 %v354, 4294901760
    %v356 = vsub.f32 %v354, %v355
    %v357 = vand.u32 %v356, 4294901760
    %358 = vmatpush1.xpose.msra.mxu0 %v357
    %359 = vmatprep.subr.mxu0 0.0
    %v360 = vand.u32 %v197, 4294901760
    %v361 = vsub.f32 %v197, %v360
    %v362 = vand.u32 %v361, 4294901760
    %v363 = vsub.f32 %v361, %v362
    %v364 = vand.u32 %v363, 4294901760
    %365 = vmatpush1.xpose.msra.mxu0 %v364
    %366 = vmatprep.subr.mxu0 0.0
    %v367 = vand.u32 %v200, 4294901760
    %v368 = vsub.f32 %v200, %v367
    %v369 = vand.u32 %v368, 4294901760
    %v370 = vsub.f32 %v368, %v369
    %v371 = vand.u32 %v370, 4294901760
    %372 = vmatpush1.xpose.msra.mxu0 %v371
    %373 = vmatprep.subr.mxu0 0.0
    %v374 = vand.u32 %v203, 4294901760
    %v375 = vsub.f32 %v203, %v374
    %v376 = vand.u32 %v375, 4294901760
    %v377 = vsub.f32 %v375, %v376
    %v378 = vand.u32 %v377, 4294901760
    %379 = vmatpush1.xpose.msra.mxu0 %v378
    %380 = vmatprep.subr.mxu0 0.0
    %v381 = vand.u32 %v206, 4294901760
    %v382 = vsub.f32 %v206, %v381
    %v383 = vand.u32 %v382, 4294901760
    %v384 = vsub.f32 %v382, %v383
    %v385 = vand.u32 %v384, 4294901760
    %386 = vmatpush1.xpose.msra.mxu0 %v385
    %387 = vmatprep.subr.mxu0 0.0
    %v388 = vand.u32 %v209, 4294901760
    %v389 = vsub.f32 %v209, %v388
    %v390 = vand.u32 %v389, 4294901760
    %v391 = vsub.f32 %v389, %v390
    %v392 = vand.u32 %v391, 4294901760
    %393 = vmatpush1.xpose.msra.mxu0 %v392
    %394 = vmatprep.subr.mxu0 0.0
    %v395 = vand.u32 %v212, 4294901760
    %v396 = vsub.f32 %v212, %v395
    %v397 = vand.u32 %v396, 4294901760
    %v398 = vsub.f32 %v396, %v397
    %v399 = vand.u32 %v398, 4294901760
    %400 = vmatpush1.xpose.msra.mxu0 %v399
    %401 = vmatprep.subr.mxu0 0.0
    %v402 = vand.u32 %v215, 4294901760
    %v403 = vsub.f32 %v215, %v402
    %v404 = vand.u32 %v403, 4294901760
    %v405 = vsub.f32 %v403, %v404
    %v406 = vand.u32 %v405, 4294901760
    %407 = vmatpush1.xpose.msra.mxu0 %v406
    %408 = vmatprep.subr.mxu0 0.0
    %v409 = vand.u32 %v218, 4294901760
    %v410 = vsub.f32 %v218, %v409
    %v411 = vand.u32 %v410, 4294901760
    %v412 = vsub.f32 %v410, %v411
    %v413 = vand.u32 %v412, 4294901760
    %414 = vmatpush1.xpose.msra.mxu0 %v413
    %415 = vmatprep.subr.mxu0 0.0
    %v416 = vand.u32 %v221, 4294901760
    %v417 = vsub.f32 %v221, %v416
    %v418 = vand.u32 %v417, 4294901760
    %v419 = vsub.f32 %v417, %v418
    %v420 = vand.u32 %v419, 4294901760
    %421 = vmatpush1.xpose.msra.mxu0 %v420
    %422 = vmatprep.subr.mxu0 0.0
    %v423 = vand.u32 %v224, 4294901760
    %v424 = vsub.f32 %v224, %v423
    %v425 = vand.u32 %v424, 4294901760
    %v426 = vsub.f32 %v424, %v425
    %v427 = vand.u32 %v426, 4294901760
    %428 = vmatpush1.xpose.msra.mxu0 %v427
    %429 = vmatprep.subr.mxu0 0.0
    %430 = vmatpush1.xpose.msra.mxu0 0.0
    %431 = vmatprep.subr.mxu0 0.0
    %432 = vmatpush1.xpose.msra.mxu0 0.0
    %433 = vmatprep.subr.mxu0 0.0
    %434 = vmatpush1.xpose.msra.mxu0 0.0
    %435 = vmatprep.subr.mxu0 0.0
    %436 = vmatpush1.xpose.msra.mxu0 0.0
    %437 = vmatprep.subr.mxu0 0.0
    %438 = vmatpush1.xpose.msra.mxu0 0.0
    %439 = vmatprep.subr.mxu0 0.0
    %440 = vmatpush1.xpose.msra.mxu0 0.0
    %441 = vmatprep.subr.mxu0 0.0
    %442 = vmatpush1.xpose.msra.mxu0 0.0
    %443 = vmatprep.subr.mxu0 0.0
    %444 = vmatpush1.xpose.msra.mxu0 0.0
    %445 = vmatprep.subr.mxu0 0.0
    %446 = vmatpush1.xpose.msra.mxu0 0.0
    %447 = vmatprep.subr.mxu0 0.0
    %448 = vmatpush1.xpose.msra.mxu0 0.0
    %449 = vmatprep.subr.mxu0 0.0
    %450 = vmatpush1.xpose.msra.mxu0 0.0
    %451 = vmatprep.subr.mxu0 0.0
    %452 = vmatpush1.xpose.msra.mxu0 0.0
    %453 = vmatprep.subr.mxu0 0.0
    %454 = vmatpush1.xpose.msra.mxu0 0.0
    %455 = vmatprep.subr.mxu0 0.0
    %456 = vmatpush1.xpose.msra.mxu0 0.0
    %457 = vmatprep.subr.mxu0 0.0
    %458 = vmatpush1.xpose.msra.mxu0 0.0
    %459 = vmatprep.subr.mxu0 0.0
    %460 = vmatpush1.xpose.msra.mxu0 0.0
    %461 = vmatprep.mubr.f32.mxu0 0.0
    %v462 = vand.u32 %v176, 4294901760
    %463 = vmatmul.mubr.f32.gmra.mrb[0].mxu0 %v462
    %v464 = vpop.f32.mrb[0].mxu0
    %v465 = vadd.f32 %v314, %v464
    %v466 = vpop.f32.mrb[0].mxu0
    %467 = vdwg.mxu0
    %468 = vmatprep.subr.mxu0 0.0
    %v469 = vand.u32 %v179, 4294901760
    %v470 = vsub.f32 %v179, %v469
    %471 = vmatpush1.xpose.msra.mxu0 %v470
    %472 = vmatprep.subr.mxu0 0.0
    %v473 = vand.u32 %v182, 4294901760
    %v474 = vsub.f32 %v182, %v473
    %475 = vmatpush1.xpose.msra.mxu0 %v474
    %476 = vmatprep.subr.mxu0 0.0
    %v477 = vand.u32 %v185, 4294901760
    %v478 = vsub.f32 %v185, %v477
    %479 = vmatpush1.xpose.msra.mxu0 %v478
    %480 = vmatprep.subr.mxu0 0.0
    %v481 = vand.u32 %v188, 4294901760
    %v482 = vsub.f32 %v188, %v481
    %483 = vmatpush1.xpose.msra.mxu0 %v482
    %484 = vmatprep.subr.mxu0 0.0
    %v485 = vand.u32 %v191, 4294901760
    %v486 = vsub.f32 %v191, %v485
    %487 = vmatpush1.xpose.msra.mxu0 %v486
    %488 = vmatprep.subr.mxu0 0.0
    %v489 = vand.u32 %v194, 4294901760
    %v490 = vsub.f32 %v194, %v489
    %491 = vmatpush1.xpose.msra.mxu0 %v490
    %492 = vmatprep.subr.mxu0 0.0
    %v493 = vand.u32 %v197, 4294901760
    %v494 = vsub.f32 %v197, %v493
    %495 = vmatpush1.xpose.msra.mxu0 %v494
    %496 = vmatprep.subr.mxu0 0.0
    %v497 = vand.u32 %v200, 4294901760
    %v498 = vsub.f32 %v200, %v497
    %499 = vmatpush1.xpose.msra.mxu0 %v498
    %500 = vmatprep.subr.mxu0 0.0
    %v501 = vand.u32 %v203, 4294901760
    %v502 = vsub.f32 %v203, %v501
    %503 = vmatpush1.xpose.msra.mxu0 %v502
    %504 = vmatprep.subr.mxu0 0.0
    %v505 = vand.u32 %v206, 4294901760
    %v506 = vsub.f32 %v206, %v505
    %507 = vmatpush1.xpose.msra.mxu0 %v506
    %508 = vmatprep.subr.mxu0 0.0
    %v509 = vand.u32 %v209, 4294901760
    %v510 = vsub.f32 %v209, %v509
    %511 = vmatpush1.xpose.msra.mxu0 %v510
    %512 = vmatprep.subr.mxu0 0.0
    %v513 = vand.u32 %v212, 4294901760
    %v514 = vsub.f32 %v212, %v513
    %515 = vmatpush1.xpose.msra.mxu0 %v514
    %516 = vmatprep.subr.mxu0 0.0
    %v517 = vand.u32 %v215, 4294901760
    %v518 = vsub.f32 %v215, %v517
    %519 = vmatpush1.xpose.msra.mxu0 %v518
    %520 = vmatprep.subr.mxu0 0.0
    %v521 = vand.u32 %v218, 4294901760
    %v522 = vsub.f32 %v218, %v521
    %523 = vmatpush1.xpose.msra.mxu0 %v522
    %524 = vmatprep.subr.mxu0 0.0
    %v525 = vand.u32 %v221, 4294901760
    %v526 = vsub.f32 %v221, %v525
    %527 = vmatpush1.xpose.msra.mxu0 %v526
    %528 = vmatprep.subr.mxu0 0.0
    %v529 = vand.u32 %v224, 4294901760
    %v530 = vsub.f32 %v224, %v529
    %531 = vmatpush1.xpose.msra.mxu0 %v530
    %532 = vmatprep.subr.mxu0 0.0
    %533 = vmatpush1.xpose.msra.mxu0 0.0
    %534 = vmatprep.subr.mxu0 0.0
    %535 = vmatpush1.xpose.msra.mxu0 0.0
    %536 = vmatprep.subr.mxu0 0.0
    %537 = vmatpush1.xpose.msra.mxu0 0.0
    %538 = vmatprep.subr.mxu0 0.0
    %539 = vmatpush1.xpose.msra.mxu0 0.0
    %540 = vmatprep.subr.mxu0 0.0
    %541 = vmatpush1.xpose.msra.mxu0 0.0
    %542 = vmatprep.subr.mxu0 0.0
    %543 = vmatpush1.xpose.msra.mxu0 0.0
    %544 = vmatprep.subr.mxu0 0.0
    %545 = vmatpush1.xpose.msra.mxu0 0.0
    %546 = vmatprep.subr.mxu0 0.0
    %547 = vmatpush1.xpose.msra.mxu0 0.0
    %548 = vmatprep.subr.mxu0 0.0
    %549 = vmatpush1.xpose.msra.mxu0 0.0
    %550 = vmatprep.subr.mxu0 0.0
    %551 = vmatpush1.xpose.msra.mxu0 0.0
    %552 = vmatprep.subr.mxu0 0.0
    %553 = vmatpush1.xpose.msra.mxu0 0.0
    %554 = vmatprep.subr.mxu0 0.0
    %555 = vmatpush1.xpose.msra.mxu0 0.0
    %556 = vmatprep.subr.mxu0 0.0
    %557 = vmatpush1.xpose.msra.mxu0 0.0
    %558 = vmatprep.subr.mxu0 0.0
    %559 = vmatpush1.xpose.msra.mxu0 0.0
    %560 = vmatprep.subr.mxu0 0.0
    %561 = vmatpush1.xpose.msra.mxu0 0.0
    %562 = vmatprep.subr.mxu0 0.0
    %563 = vmatpush1.xpose.msra.mxu0 0.0
    %564 = vmatprep.mubr.f32.mxu0 0.0
    %v565 = vand.u32 %v176, 4294901760
    %v566 = vsub.f32 %v176, %v565
    %567 = vmatmul.mubr.f32.gmra.mrb[0].mxu0 %v566
    %v568 = vpop.f32.mrb[0].mxu0
    %v569 = vadd.f32 %v465, %v568
    %v570 = vpop.f32.mrb[0].mxu0
    %571 = vdwg.mxu0
    %572 = vmatprep.subr.mxu0 0.0
    %v573 = vand.u32 %v179, 4294901760
    %574 = vmatpush1.xpose.msra.mxu0 %v573
    %575 = vmatprep.subr.mxu0 0.0
    %v576 = vand.u32 %v182, 4294901760
    %577 = vmatpush1.xpose.msra.mxu0 %v576
    %578 = vmatprep.subr.mxu0 0.0
    %v579 = vand.u32 %v185, 4294901760
    %580 = vmatpush1.xpose.msra.mxu0 %v579
    %581 = vmatprep.subr.mxu0 0.0
    %v582 = vand.u32 %v188, 4294901760
    %583 = vmatpush1.xpose.msra.mxu0 %v582
    %584 = vmatprep.subr.mxu0 0.0
    %v585 = vand.u32 %v191, 4294901760
    %586 = vmatpush1.xpose.msra.mxu0 %v585
    %587 = vmatprep.subr.mxu0 0.0
    %v588 = vand.u32 %v194, 4294901760
    %589 = vmatpush1.xpose.msra.mxu0 %v588
    %590 = vmatprep.subr.mxu0 0.0
    %v591 = vand.u32 %v197, 4294901760
    %592 = vmatpush1.xpose.msra.mxu0 %v591
    %593 = vmatprep.subr.mxu0 0.0
    %v594 = vand.u32 %v200, 4294901760
    %595 = vmatpush1.xpose.msra.mxu0 %v594
    %596 = vmatprep.subr.mxu0 0.0
    %v597 = vand.u32 %v203, 4294901760
    %598 = vmatpush1.xpose.msra.mxu0 %v597
    %599 = vmatprep.subr.mxu0 0.0
    %v600 = vand.u32 %v206, 4294901760
    %601 = vmatpush1.xpose.msra.mxu0 %v600
    %602 = vmatprep.subr.mxu0 0.0
    %v603 = vand.u32 %v209, 4294901760
    %604 = vmatpush1.xpose.msra.mxu0 %v603
    %605 = vmatprep.subr.mxu0 0.0
    %v606 = vand.u32 %v212, 4294901760
    %607 = vmatpush1.xpose.msra.mxu0 %v606
    %608 = vmatprep.subr.mxu0 0.0
    %v609 = vand.u32 %v215, 4294901760
    %610 = vmatpush1.xpose.msra.mxu0 %v609
    %611 = vmatprep.subr.mxu0 0.0
    %v612 = vand.u32 %v218, 4294901760
    %613 = vmatpush1.xpose.msra.mxu0 %v612
    %614 = vmatprep.subr.mxu0 0.0
    %v615 = vand.u32 %v221, 4294901760
    %616 = vmatpush1.xpose.msra.mxu0 %v615
    %617 = vmatprep.subr.mxu0 0.0
    %v618 = vand.u32 %v224, 4294901760
    %619 = vmatpush1.xpose.msra.mxu0 %v618
    %620 = vmatprep.subr.mxu0 0.0
    %621 = vmatpush1.xpose.msra.mxu0 0.0
    %622 = vmatprep.subr.mxu0 0.0
    %623 = vmatpush1.xpose.msra.mxu0 0.0
    %624 = vmatprep.subr.mxu0 0.0
    %625 = vmatpush1.xpose.msra.mxu0 0.0
    %626 = vmatprep.subr.mxu0 0.0
    %627 = vmatpush1.xpose.msra.mxu0 0.0
    %628 = vmatprep.subr.mxu0 0.0
    %629 = vmatpush1.xpose.msra.mxu0 0.0
    %630 = vmatprep.subr.mxu0 0.0
    %631 = vmatpush1.xpose.msra.mxu0 0.0
    %632 = vmatprep.subr.mxu0 0.0
    %633 = vmatpush1.xpose.msra.mxu0 0.0
    %634 = vmatprep.subr.mxu0 0.0
    %635 = vmatpush1.xpose.msra.mxu0 0.0
    %636 = vmatprep.subr.mxu0 0.0
    %637 = vmatpush1.xpose.msra.mxu0 0.0
    %638 = vmatprep.subr.mxu0 0.0
    %639 = vmatpush1.xpose.msra.mxu0 0.0
    %640 = vmatprep.subr.mxu0 0.0
    %641 = vmatpush1.xpose.msra.mxu0 0.0
    %642 = vmatprep.subr.mxu0 0.0
    %643 = vmatpush1.xpose.msra.mxu0 0.0
    %644 = vmatprep.subr.mxu0 0.0
    %645 = vmatpush1.xpose.msra.mxu0 0.0
    %646 = vmatprep.subr.mxu0 0.0
    %647 = vmatpush1.xpose.msra.mxu0 0.0
    %648 = vmatprep.subr.mxu0 0.0
    %649 = vmatpush1.xpose.msra.mxu0 0.0
    %650 = vmatprep.subr.mxu0 0.0
    %651 = vmatpush1.xpose.msra.mxu0 0.0
    %652 = vmatprep.mubr.f32.mxu0 0.0
    %v653 = vand.u32 %v176, 4294901760
    %v654 = vsub.f32 %v176, %v653
    %v655 = vand.u32 %v654, 4294901760
    %656 = vmatmul.mubr.f32.gmra.mrb[0].mxu0 %v655
    %v657 = vpop.f32.mrb[0].mxu0
    %v658 = vadd.f32 %v569, %v657
    %v659 = vpop.f32.mrb[0].mxu0
    %660 = vdwg.mxu0
    %661 = vmatprep.subr.mxu0 0.0
    %v662 = vand.u32 %v179, 4294901760
    %v663 = vsub.f32 %v179, %v662
    %v664 = vand.u32 %v663, 4294901760
    %665 = vmatpush1.xpose.msra.mxu0 %v664
    %666 = vmatprep.subr.mxu0 0.0
    %v667 = vand.u32 %v182, 4294901760
    %v668 = vsub.f32 %v182, %v667
    %v669 = vand.u32 %v668, 4294901760
    %670 = vmatpush1.xpose.msra.mxu0 %v669
    %671 = vmatprep.subr.mxu0 0.0
    %v672 = vand.u32 %v185, 4294901760
    %v673 = vsub.f32 %v185, %v672
    %v674 = vand.u32 %v673, 4294901760
    %675 = vmatpush1.xpose.msra.mxu0 %v674
    %676 = vmatprep.subr.mxu0 0.0
    %v677 = vand.u32 %v188, 4294901760
    %v678 = vsub.f32 %v188, %v677
    %v679 = vand.u32 %v678, 4294901760
    %680 = vmatpush1.xpose.msra.mxu0 %v679
    %681 = vmatprep.subr.mxu0 0.0
    %v682 = vand.u32 %v191, 4294901760
    %v683 = vsub.f32 %v191, %v682
    %v684 = vand.u32 %v683, 4294901760
    %685 = vmatpush1.xpose.msra.mxu0 %v684
    %686 = vmatprep.subr.mxu0 0.0
    %v687 = vand.u32 %v194, 4294901760
    %v688 = vsub.f32 %v194, %v687
    %v689 = vand.u32 %v688, 4294901760
    %690 = vmatpush1.xpose.msra.mxu0 %v689
    %691 = vmatprep.subr.mxu0 0.0
    %v692 = vand.u32 %v197, 4294901760
    %v693 = vsub.f32 %v197, %v692
    %v694 = vand.u32 %v693, 4294901760
    %695 = vmatpush1.xpose.msra.mxu0 %v694
    %696 = vmatprep.subr.mxu0 0.0
    %v697 = vand.u32 %v200, 4294901760
    %v698 = vsub.f32 %v200, %v697
    %v699 = vand.u32 %v698, 4294901760
    %700 = vmatpush1.xpose.msra.mxu0 %v699
    %701 = vmatprep.subr.mxu0 0.0
    %v702 = vand.u32 %v203, 4294901760
    %v703 = vsub.f32 %v203, %v702
    %v704 = vand.u32 %v703, 4294901760
    %705 = vmatpush1.xpose.msra.mxu0 %v704
    %706 = vmatprep.subr.mxu0 0.0
    %v707 = vand.u32 %v206, 4294901760
    %v708 = vsub.f32 %v206, %v707
    %v709 = vand.u32 %v708, 4294901760
    %710 = vmatpush1.xpose.msra.mxu0 %v709
    %711 = vmatprep.subr.mxu0 0.0
    %v712 = vand.u32 %v209, 4294901760
    %v713 = vsub.f32 %v209, %v712
    %v714 = vand.u32 %v713, 4294901760
    %715 = vmatpush1.xpose.msra.mxu0 %v714
    %716 = vmatprep.subr.mxu0 0.0
    %v717 = vand.u32 %v212, 4294901760
    %v718 = vsub.f32 %v212, %v717
    %v719 = vand.u32 %v718, 4294901760
    %720 = vmatpush1.xpose.msra.mxu0 %v719
    %721 = vmatprep.subr.mxu0 0.0
    %v722 = vand.u32 %v215, 4294901760
    %v723 = vsub.f32 %v215, %v722
    %v724 = vand.u32 %v723, 4294901760
    %725 = vmatpush1.xpose.msra.mxu0 %v724
    %726 = vmatprep.subr.mxu0 0.0
    %v727 = vand.u32 %v218, 4294901760
    %v728 = vsub.f32 %v218, %v727
    %v729 = vand.u32 %v728, 4294901760
    %730 = vmatpush1.xpose.msra.mxu0 %v729
    %731 = vmatprep.subr.mxu0 0.0
    %v732 = vand.u32 %v221, 4294901760
    %v733 = vsub.f32 %v221, %v732
    %v734 = vand.u32 %v733, 4294901760
    %735 = vmatpush1.xpose.msra.mxu0 %v734
    %736 = vmatprep.subr.mxu0 0.0
    %v737 = vand.u32 %v224, 4294901760
    %v738 = vsub.f32 %v224, %v737
    %v739 = vand.u32 %v738, 4294901760
    %740 = vmatpush1.xpose.msra.mxu0 %v739
    %741 = vmatprep.subr.mxu0 0.0
    %742 = vmatpush1.xpose.msra.mxu0 0.0
    %743 = vmatprep.subr.mxu0 0.0
    %744 = vmatpush1.xpose.msra.mxu0 0.0
    %745 = vmatprep.subr.mxu0 0.0
    %746 = vmatpush1.xpose.msra.mxu0 0.0
    %747 = vmatprep.subr.mxu0 0.0
    %748 = vmatpush1.xpose.msra.mxu0 0.0
    %749 = vmatprep.subr.mxu0 0.0
    %750 = vmatpush1.xpose.msra.mxu0 0.0
    %751 = vmatprep.subr.mxu0 0.0
    %752 = vmatpush1.xpose.msra.mxu0 0.0
    %753 = vmatprep.subr.mxu0 0.0
    %754 = vmatpush1.xpose.msra.mxu0 0.0
    %755 = vmatprep.subr.mxu0 0.0
    %756 = vmatpush1.xpose.msra.mxu0 0.0
    %757 = vmatprep.subr.mxu0 0.0
    %758 = vmatpush1.xpose.msra.mxu0 0.0
    %759 = vmatprep.subr.mxu0 0.0
    %760 = vmatpush1.xpose.msra.mxu0 0.0
    %761 = vmatprep.subr.mxu0 0.0
    %762 = vmatpush1.xpose.msra.mxu0 0.0
    %763 = vmatprep.subr.mxu0 0.0
    %764 = vmatpush1.xpose.msra.mxu0 0.0
    %765 = vmatprep.subr.mxu0 0.0
    %766 = vmatpush1.xpose.msra.mxu0 0.0
    %767 = vmatprep.subr.mxu0 0.0
    %768 = vmatpush1.xpose.msra.mxu0 0.0
    %769 = vmatprep.subr.mxu0 0.0
    %770 = vmatpush1.xpose.msra.mxu0 0.0
    %771 = vmatprep.subr.mxu0 0.0
    %772 = vmatpush1.xpose.msra.mxu0 0.0
    %773 = vmatprep.mubr.f32.mxu0 0.0
    %v774 = vand.u32 %v176, 4294901760
    %775 = vmatmul.mubr.f32.gmra.mrb[0].mxu0 %v774
    %v776 = vpop.f32.mrb[0].mxu0
    %v777 = vadd.f32 %v658, %v776
    %v778 = vpop.f32.mrb[0].mxu0
    %779 = vdwg.mxu0
    %780 = vmatprep.subr.mxu0 0.0
    %v781 = vand.u32 %v179, 4294901760
    %782 = vmatpush1.xpose.msra.mxu0 %v781
    %783 = vmatprep.subr.mxu0 0.0
    %v784 = vand.u32 %v182, 4294901760
    %785 = vmatpush1.xpose.msra.mxu0 %v784
    %786 = vmatprep.subr.mxu0 0.0
    %v787 = vand.u32 %v185, 4294901760
    %788 = vmatpush1.xpose.msra.mxu0 %v787
    %789 = vmatprep.subr.mxu0 0.0
    %v790 = vand.u32 %v188, 4294901760
    %791 = vmatpush1.xpose.msra.mxu0 %v790
    %792 = vmatprep.subr.mxu0 0.0
    %v793 = vand.u32 %v191, 4294901760
    %794 = vmatpush1.xpose.msra.mxu0 %v793
    %795 = vmatprep.subr.mxu0 0.0
    %v796 = vand.u32 %v194, 4294901760
    %797 = vmatpush1.xpose.msra.mxu0 %v796
    %798 = vmatprep.subr.mxu0 0.0
    %v799 = vand.u32 %v197, 4294901760
    %800 = vmatpush1.xpose.msra.mxu0 %v799
    %801 = vmatprep.subr.mxu0 0.0
    %v802 = vand.u32 %v200, 4294901760
    %803 = vmatpush1.xpose.msra.mxu0 %v802
    %804 = vmatprep.subr.mxu0 0.0
    %v805 = vand.u32 %v203, 4294901760
    %806 = vmatpush1.xpose.msra.mxu0 %v805
    %807 = vmatprep.subr.mxu0 0.0
    %v808 = vand.u32 %v206, 4294901760
    %809 = vmatpush1.xpose.msra.mxu0 %v808
    %810 = vmatprep.subr.mxu0 0.0
    %v811 = vand.u32 %v209, 4294901760
    %812 = vmatpush1.xpose.msra.mxu0 %v811
    %813 = vmatprep.subr.mxu0 0.0
    %v814 = vand.u32 %v212, 4294901760
    %815 = vmatpush1.xpose.msra.mxu0 %v814
    %816 = vmatprep.subr.mxu0 0.0
    %v817 = vand.u32 %v215, 4294901760
    %818 = vmatpush1.xpose.msra.mxu0 %v817
    %819 = vmatprep.subr.mxu0 0.0
    %v820 = vand.u32 %v218, 4294901760
    %821 = vmatpush1.xpose.msra.mxu0 %v820
    %822 = vmatprep.subr.mxu0 0.0
    %v823 = vand.u32 %v221, 4294901760
    %824 = vmatpush1.xpose.msra.mxu0 %v823
    %825 = vmatprep.subr.mxu0 0.0
    %v826 = vand.u32 %v224, 4294901760
    %827 = vmatpush1.xpose.msra.mxu0 %v826
    %828 = vmatprep.subr.mxu0 0.0
    %829 = vmatpush1.xpose.msra.mxu0 0.0
    %830 = vmatprep.subr.mxu0 0.0
    %831 = vmatpush1.xpose.msra.mxu0 0.0
    %832 = vmatprep.subr.mxu0 0.0
    %833 = vmatpush1.xpose.msra.mxu0 0.0
    %834 = vmatprep.subr.mxu0 0.0
    %835 = vmatpush1.xpose.msra.mxu0 0.0
    %836 = vmatprep.subr.mxu0 0.0
    %837 = vmatpush1.xpose.msra.mxu0 0.0
    %838 = vmatprep.subr.mxu0 0.0
    %839 = vmatpush1.xpose.msra.mxu0 0.0
    %840 = vmatprep.subr.mxu0 0.0
    %841 = vmatpush1.xpose.msra.mxu0 0.0
    %842 = vmatprep.subr.mxu0 0.0
    %843 = vmatpush1.xpose.msra.mxu0 0.0
    %844 = vmatprep.subr.mxu0 0.0
    %845 = vmatpush1.xpose.msra.mxu0 0.0
    %846 = vmatprep.subr.mxu0 0.0
    %847 = vmatpush1.xpose.msra.mxu0 0.0
    %848 = vmatprep.subr.mxu0 0.0
    %849 = vmatpush1.xpose.msra.mxu0 0.0
    %850 = vmatprep.subr.mxu0 0.0
    %851 = vmatpush1.xpose.msra.mxu0 0.0
    %852 = vmatprep.subr.mxu0 0.0
    %853 = vmatpush1.xpose.msra.mxu0 0.0
    %854 = vmatprep.subr.mxu0 0.0
    %855 = vmatpush1.xpose.msra.mxu0 0.0
    %856 = vmatprep.subr.mxu0 0.0
    %857 = vmatpush1.xpose.msra.mxu0 0.0
    %858 = vmatprep.subr.mxu0 0.0
    %859 = vmatpush1.xpose.msra.mxu0 0.0
    %860 = vmatprep.mubr.f32.mxu0 0.0
    %v861 = vand.u32 %v176, 4294901760
    %862 = vmatmul.mubr.f32.gmra.mrb[0].mxu0 %v861
    %v863 = vpop.f32.mrb[0].mxu0
    %v864 = vadd.f32 %v777, %v863
    %v865 = vpop.f32.mrb[0].mxu0
    %866 = vdwg.mxu0
    %v867 = vrsqrt.pop %v864
    %v868 = vmul.f32 %v864, %v867
    %vm869 = vcmp.eq.f32.partialorder %v864, inf
    %v870 = vsel %vm869, %v864, %v868
    %vm871 = vcmp.eq.f32.partialorder %v864, 0.0
    %v872 = vand.u32 %v864, 2147483648
    %v873 = vsel %vm871, %v872, %v870
    %v875 = vsel %vm174, %v158, 0
    %v878 = vsel %vm174, %v159, 0
    %v881 = vsel %vm174, %v160, 0
    %v884 = vsel %vm174, %v161, 0
    %v887 = vsel %vm174, %v162, 0
    %v890 = vsel %vm174, %v163, 0
    %v893 = vsel %vm174, %v164, 0
    %v896 = vsel %vm174, %v165, 0
    %v899 = vsel %vm174, %v166, 0
    %v902 = vsel %vm174, %v167, 0
    %v905 = vsel %vm174, %v168, 0
    %v908 = vsel %vm174, %v169, 0
    %v911 = vsel %vm174, %v170, 0
    %v914 = vsel %vm174, %v171, 0
    %v917 = vsel %vm174, %v172, 0
    %v920 = vsel %vm174, %v173, 0
    %922 = vmatprep.subr.mxu0 0.0
    %v923 = vand.u32 %v875, 4294901760
    %924 = vmatpush1.xpose.msra.mxu0 %v923
    %925 = vmatprep.subr.mxu0 0.0
    %v926 = vand.u32 %v878, 4294901760
    %927 = vmatpush1.xpose.msra.mxu0 %v926
    %928 = vmatprep.subr.mxu0 0.0
    %v929 = vand.u32 %v881, 4294901760
    %930 = vmatpush1.xpose.msra.mxu0 %v929
    %931 = vmatprep.subr.mxu0 0.0
    %v932 = vand.u32 %v884, 4294901760
    %933 = vmatpush1.xpose.msra.mxu0 %v932
    %934 = vmatprep.subr.mxu0 0.0
    %v935 = vand.u32 %v887, 4294901760
    %936 = vmatpush1.xpose.msra.mxu0 %v935
    %937 = vmatprep.subr.mxu0 0.0
    %v938 = vand.u32 %v890, 4294901760
    %939 = vmatpush1.xpose.msra.mxu0 %v938
    %940 = vmatprep.subr.mxu0 0.0
    %v941 = vand.u32 %v893, 4294901760
    %942 = vmatpush1.xpose.msra.mxu0 %v941
    %943 = vmatprep.subr.mxu0 0.0
    %v944 = vand.u32 %v896, 4294901760
    %945 = vmatpush1.xpose.msra.mxu0 %v944
    %946 = vmatprep.subr.mxu0 0.0
    %v947 = vand.u32 %v899, 4294901760
    %948 = vmatpush1.xpose.msra.mxu0 %v947
    %949 = vmatprep.subr.mxu0 0.0
    %v950 = vand.u32 %v902, 4294901760
    %951 = vmatpush1.xpose.msra.mxu0 %v950
    %952 = vmatprep.subr.mxu0 0.0
    %v953 = vand.u32 %v905, 4294901760
    %954 = vmatpush1.xpose.msra.mxu0 %v953
    %955 = vmatprep.subr.mxu0 0.0
    %v956 = vand.u32 %v908, 4294901760
    %957 = vmatpush1.xpose.msra.mxu0 %v956
    %958 = vmatprep.subr.mxu0 0.0
    %v959 = vand.u32 %v911, 4294901760
    %960 = vmatpush1.xpose.msra.mxu0 %v959
    %961 = vmatprep.subr.mxu0 0.0
    %v962 = vand.u32 %v914, 4294901760
    %963 = vmatpush1.xpose.msra.mxu0 %v962
    %964 = vmatprep.subr.mxu0 0.0
    %v965 = vand.u32 %v917, 4294901760
    %966 = vmatpush1.xpose.msra.mxu0 %v965
    %967 = vmatprep.subr.mxu0 0.0
    %v968 = vand.u32 %v920, 4294901760
    %969 = vmatpush1.xpose.msra.mxu0 %v968
    %970 = vmatprep.subr.mxu0 0.0
    %971 = vmatpush1.xpose.msra.mxu0 0.0
    %972 = vmatprep.subr.mxu0 0.0
    %973 = vmatpush1.xpose.msra.mxu0 0.0
    %974 = vmatprep.subr.mxu0 0.0
    %975 = vmatpush1.xpose.msra.mxu0 0.0
    %976 = vmatprep.subr.mxu0 0.0
    %977 = vmatpush1.xpose.msra.mxu0 0.0
    %978 = vmatprep.subr.mxu0 0.0
    %979 = vmatpush1.xpose.msra.mxu0 0.0
    %980 = vmatprep.subr.mxu0 0.0
    %981 = vmatpush1.xpose.msra.mxu0 0.0
    %982 = vmatprep.subr.mxu0 0.0
    %983 = vmatpush1.xpose.msra.mxu0 0.0
    %984 = vmatprep.subr.mxu0 0.0
    %985 = vmatpush1.xpose.msra.mxu0 0.0
    %986 = vmatprep.subr.mxu0 0.0
    %987 = vmatpush1.xpose.msra.mxu0 0.0
    %988 = vmatprep.subr.mxu0 0.0
    %989 = vmatpush1.xpose.msra.mxu0 0.0
    %990 = vmatprep.subr.mxu0 0.0
    %991 = vmatpush1.xpose.msra.mxu0 0.0
    %992 = vmatprep.subr.mxu0 0.0
    %993 = vmatpush1.xpose.msra.mxu0 0.0
    %994 = vmatprep.subr.mxu0 0.0
    %995 = vmatpush1.xpose.msra.mxu0 0.0
    %996 = vmatprep.subr.mxu0 0.0
    %997 = vmatpush1.xpose.msra.mxu0 0.0
    %998 = vmatprep.subr.mxu0 0.0
    %999 = vmatpush1.xpose.msra.mxu0 0.0
    %1000 = vmatprep.subr.mxu0 0.0
    %1001 = vmatpush1.xpose.msra.mxu0 0.0
    %1002 = vmatprep.mubr.f32.mxu0 0.0
    %v1003 = vand.u32 %v176, 4294901760
    %v1004 = vsub.f32 %v176, %v1003
    %v1005 = vand.u32 %v1004, 4294901760
    %v1006 = vsub.f32 %v1004, %v1005
    %v1007 = vand.u32 %v1006, 4294901760
    %1008 = vmatmul.mubr.f32.gmra.mrb[0].mxu0 %v1007
    %v1009 = vpop.f32.mrb[0].mxu0
    %v1010 = vadd.f32 1e-08, %v1009
    %v1011 = vpop.f32.mrb[0].mxu0
    %1012 = vdwg.mxu0
    %1013 = vmatprep.subr.mxu0 0.0
    %v1014 = vand.u32 %v875, 4294901760
    %v1015 = vsub.f32 %v875, %v1014
    %v1016 = vand.u32 %v1015, 4294901760
    %v1017 = vsub.f32 %v1015, %v1016
    %v1018 = vand.u32 %v1017, 4294901760
    %1019 = vmatpush1.xpose.msra.mxu0 %v1018
    %1020 = vmatprep.subr.mxu0 0.0
    %v1021 = vand.u32 %v878, 4294901760
    %v1022 = vsub.f32 %v878, %v1021
    %v1023 = vand.u32 %v1022, 4294901760
    %v1024 = vsub.f32 %v1022, %v1023
    %v1025 = vand.u32 %v1024, 4294901760
    %1026 = vmatpush1.xpose.msra.mxu0 %v1025
    %1027 = vmatprep.subr.mxu0 0.0
    %v1028 = vand.u32 %v881, 4294901760
    %v1029 = vsub.f32 %v881, %v1028
    %v1030 = vand.u32 %v1029, 4294901760
    %v1031 = vsub.f32 %v1029, %v1030
    %v1032 = vand.u32 %v1031, 4294901760
    %1033 = vmatpush1.xpose.msra.mxu0 %v1032
    %1034 = vmatprep.subr.mxu0 0.0
    %v1035 = vand.u32 %v884, 4294901760
    %v1036 = vsub.f32 %v884, %v1035
    %v1037 = vand.u32 %v1036, 4294901760
    %v1038 = vsub.f32 %v1036, %v1037
    %v1039 = vand.u32 %v1038, 4294901760
    %1040 = vmatpush1.xpose.msra.mxu0 %v1039
    %1041 = vmatprep.subr.mxu0 0.0
    %v1042 = vand.u32 %v887, 4294901760
    %v1043 = vsub.f32 %v887, %v1042
    %v1044 = vand.u32 %v1043, 4294901760
    %v1045 = vsub.f32 %v1043, %v1044
    %v1046 = vand.u32 %v1045, 4294901760
    %1047 = vmatpush1.xpose.msra.mxu0 %v1046
    %1048 = vmatprep.subr.mxu0 0.0
    %v1049 = vand.u32 %v890, 4294901760
    %v1050 = vsub.f32 %v890, %v1049
    %v1051 = vand.u32 %v1050, 4294901760
    %v1052 = vsub.f32 %v1050, %v1051
    %v1053 = vand.u32 %v1052, 4294901760
    %1054 = vmatpush1.xpose.msra.mxu0 %v1053
    %1055 = vmatprep.subr.mxu0 0.0
    %v1056 = vand.u32 %v893, 4294901760
    %v1057 = vsub.f32 %v893, %v1056
    %v1058 = vand.u32 %v1057, 4294901760
    %v1059 = vsub.f32 %v1057, %v1058
    %v1060 = vand.u32 %v1059, 4294901760
    %1061 = vmatpush1.xpose.msra.mxu0 %v1060
    %1062 = vmatprep.subr.mxu0 0.0
    %v1063 = vand.u32 %v896, 4294901760
    %v1064 = vsub.f32 %v896, %v1063
    %v1065 = vand.u32 %v1064, 4294901760
    %v1066 = vsub.f32 %v1064, %v1065
    %v1067 = vand.u32 %v1066, 4294901760
    %1068 = vmatpush1.xpose.msra.mxu0 %v1067
    %1069 = vmatprep.subr.mxu0 0.0
    %v1070 = vand.u32 %v899, 4294901760
    %v1071 = vsub.f32 %v899, %v1070
    %v1072 = vand.u32 %v1071, 4294901760
    %v1073 = vsub.f32 %v1071, %v1072
    %v1074 = vand.u32 %v1073, 4294901760
    %1075 = vmatpush1.xpose.msra.mxu0 %v1074
    %1076 = vmatprep.subr.mxu0 0.0
    %v1077 = vand.u32 %v902, 4294901760
    %v1078 = vsub.f32 %v902, %v1077
    %v1079 = vand.u32 %v1078, 4294901760
    %v1080 = vsub.f32 %v1078, %v1079
    %v1081 = vand.u32 %v1080, 4294901760
    %1082 = vmatpush1.xpose.msra.mxu0 %v1081
    %1083 = vmatprep.subr.mxu0 0.0
    %v1084 = vand.u32 %v905, 4294901760
    %v1085 = vsub.f32 %v905, %v1084
    %v1086 = vand.u32 %v1085, 4294901760
    %v1087 = vsub.f32 %v1085, %v1086
    %v1088 = vand.u32 %v1087, 4294901760
    %1089 = vmatpush1.xpose.msra.mxu0 %v1088
    %1090 = vmatprep.subr.mxu0 0.0
    %v1091 = vand.u32 %v908, 4294901760
    %v1092 = vsub.f32 %v908, %v1091
    %v1093 = vand.u32 %v1092, 4294901760
    %v1094 = vsub.f32 %v1092, %v1093
    %v1095 = vand.u32 %v1094, 4294901760
    %1096 = vmatpush1.xpose.msra.mxu0 %v1095
    %1097 = vmatprep.subr.mxu0 0.0
    %v1098 = vand.u32 %v911, 4294901760
    %v1099 = vsub.f32 %v911, %v1098
    %v1100 = vand.u32 %v1099, 4294901760
    %v1101 = vsub.f32 %v1099, %v1100
    %v1102 = vand.u32 %v1101, 4294901760
    %1103 = vmatpush1.xpose.msra.mxu0 %v1102
    %1104 = vmatprep.subr.mxu0 0.0
    %v1105 = vand.u32 %v914, 4294901760
    %v1106 = vsub.f32 %v914, %v1105
    %v1107 = vand.u32 %v1106, 4294901760
    %v1108 = vsub.f32 %v1106, %v1107
    %v1109 = vand.u32 %v1108, 4294901760
    %1110 = vmatpush1.xpose.msra.mxu0 %v1109
    %1111 = vmatprep.subr.mxu0 0.0
    %v1112 = vand.u32 %v917, 4294901760
    %v1113 = vsub.f32 %v917, %v1112
    %v1114 = vand.u32 %v1113, 4294901760
    %v1115 = vsub.f32 %v1113, %v1114
    %v1116 = vand.u32 %v1115, 4294901760
    %1117 = vmatpush1.xpose.msra.mxu0 %v1116
    %1118 = vmatprep.subr.mxu0 0.0
    %v1119 = vand.u32 %v920, 4294901760
    %v1120 = vsub.f32 %v920, %v1119
    %v1121 = vand.u32 %v1120, 4294901760
    %v1122 = vsub.f32 %v1120, %v1121
    %v1123 = vand.u32 %v1122, 4294901760
    %1124 = vmatpush1.xpose.msra.mxu0 %v1123
    %1125 = vmatprep.subr.mxu0 0.0
    %1126 = vmatpush1.xpose.msra.mxu0 0.0
    %1127 = vmatprep.subr.mxu0 0.0
    %1128 = vmatpush1.xpose.msra.mxu0 0.0
    %1129 = vmatprep.subr.mxu0 0.0
    %1130 = vmatpush1.xpose.msra.mxu0 0.0
    %1131 = vmatprep.subr.mxu0 0.0
    %1132 = vmatpush1.xpose.msra.mxu0 0.0
    %1133 = vmatprep.subr.mxu0 0.0
    %1134 = vmatpush1.xpose.msra.mxu0 0.0
    %1135 = vmatprep.subr.mxu0 0.0
    %1136 = vmatpush1.xpose.msra.mxu0 0.0
    %1137 = vmatprep.subr.mxu0 0.0
    %1138 = vmatpush1.xpose.msra.mxu0 0.0
    %1139 = vmatprep.subr.mxu0 0.0
    %1140 = vmatpush1.xpose.msra.mxu0 0.0
    %1141 = vmatprep.subr.mxu0 0.0
    %1142 = vmatpush1.xpose.msra.mxu0 0.0
    %1143 = vmatprep.subr.mxu0 0.0
    %1144 = vmatpush1.xpose.msra.mxu0 0.0
    %1145 = vmatprep.subr.mxu0 0.0
    %1146 = vmatpush1.xpose.msra.mxu0 0.0
    %1147 = vmatprep.subr.mxu0 0.0
    %1148 = vmatpush1.xpose.msra.mxu0 0.0
    %1149 = vmatprep.subr.mxu0 0.0
    %1150 = vmatpush1.xpose.msra.mxu0 0.0
    %1151 = vmatprep.subr.mxu0 0.0
    %1152 = vmatpush1.xpose.msra.mxu0 0.0
    %1153 = vmatprep.subr.mxu0 0.0
    %1154 = vmatpush1.xpose.msra.mxu0 0.0
    %1155 = vmatprep.subr.mxu0 0.0
    %1156 = vmatpush1.xpose.msra.mxu0 0.0
    %1157 = vmatprep.mubr.f32.mxu0 0.0
    %v1158 = vand.u32 %v176, 4294901760
    %1159 = vmatmul.mubr.f32.gmra.mrb[0].mxu0 %v1158
    %v1160 = vpop.f32.mrb[0].mxu0
    %v1161 = vadd.f32 %v1010, %v1160
    %v1162 = vpop.f32.mrb[0].mxu0
    %1163 = vdwg.mxu0
    %1164 = vmatprep.subr.mxu0 0.0
    %v1165 = vand.u32 %v875, 4294901760
    %v1166 = vsub.f32 %v875, %v1165
    %1167 = vmatpush1.xpose.msra.mxu0 %v1166
    %1168 = vmatprep.subr.mxu0 0.0
    %v1169 = vand.u32 %v878, 4294901760
    %v1170 = vsub.f32 %v878, %v1169
    %1171 = vmatpush1.xpose.msra.mxu0 %v1170
    %1172 = vmatprep.subr.mxu0 0.0
    %v1173 = vand.u32 %v881, 4294901760
    %v1174 = vsub.f32 %v881, %v1173
    %1175 = vmatpush1.xpose.msra.mxu0 %v1174
    %1176 = vmatprep.subr.mxu0 0.0
    %v1177 = vand.u32 %v884, 4294901760
    %v1178 = vsub.f32 %v884, %v1177
    %1179 = vmatpush1.xpose.msra.mxu0 %v1178
    %1180 = vmatprep.subr.mxu0 0.0
    %v1181 = vand.u32 %v887, 4294901760
    %v1182 = vsub.f32 %v887, %v1181
    %1183 = vmatpush1.xpose.msra.mxu0 %v1182
    %1184 = vmatprep.subr.mxu0 0.0
    %v1185 = vand.u32 %v890, 4294901760
    %v1186 = vsub.f32 %v890, %v1185
    %1187 = vmatpush1.xpose.msra.mxu0 %v1186
    %1188 = vmatprep.subr.mxu0 0.0
    %v1189 = vand.u32 %v893, 4294901760
    %v1190 = vsub.f32 %v893, %v1189
    %1191 = vmatpush1.xpose.msra.mxu0 %v1190
    %1192 = vmatprep.subr.mxu0 0.0
    %v1193 = vand.u32 %v896, 4294901760
    %v1194 = vsub.f32 %v896, %v1193
    %1195 = vmatpush1.xpose.msra.mxu0 %v1194
    %1196 = vmatprep.subr.mxu0 0.0
    %v1197 = vand.u32 %v899, 4294901760
    %v1198 = vsub.f32 %v899, %v1197
    %1199 = vmatpush1.xpose.msra.mxu0 %v1198
    %1200 = vmatprep.subr.mxu0 0.0
    %v1201 = vand.u32 %v902, 4294901760
    %v1202 = vsub.f32 %v902, %v1201
    %1203 = vmatpush1.xpose.msra.mxu0 %v1202
    %1204 = vmatprep.subr.mxu0 0.0
    %v1205 = vand.u32 %v905, 4294901760
    %v1206 = vsub.f32 %v905, %v1205
    %1207 = vmatpush1.xpose.msra.mxu0 %v1206
    %1208 = vmatprep.subr.mxu0 0.0
    %v1209 = vand.u32 %v908, 4294901760
    %v1210 = vsub.f32 %v908, %v1209
    %1211 = vmatpush1.xpose.msra.mxu0 %v1210
    %1212 = vmatprep.subr.mxu0 0.0
    %v1213 = vand.u32 %v911, 4294901760
    %v1214 = vsub.f32 %v911, %v1213
    %1215 = vmatpush1.xpose.msra.mxu0 %v1214
    %1216 = vmatprep.subr.mxu0 0.0
    %v1217 = vand.u32 %v914, 4294901760
    %v1218 = vsub.f32 %v914, %v1217
    %1219 = vmatpush1.xpose.msra.mxu0 %v1218
    %1220 = vmatprep.subr.mxu0 0.0
    %v1221 = vand.u32 %v917, 4294901760
    %v1222 = vsub.f32 %v917, %v1221
    %1223 = vmatpush1.xpose.msra.mxu0 %v1222
    %1224 = vmatprep.subr.mxu0 0.0
    %v1225 = vand.u32 %v920, 4294901760
    %v1226 = vsub.f32 %v920, %v1225
    %1227 = vmatpush1.xpose.msra.mxu0 %v1226
    %1228 = vmatprep.subr.mxu0 0.0
    %1229 = vmatpush1.xpose.msra.mxu0 0.0
    %1230 = vmatprep.subr.mxu0 0.0
    %1231 = vmatpush1.xpose.msra.mxu0 0.0
    %1232 = vmatprep.subr.mxu0 0.0
    %1233 = vmatpush1.xpose.msra.mxu0 0.0
    %1234 = vmatprep.subr.mxu0 0.0
    %1235 = vmatpush1.xpose.msra.mxu0 0.0
    %1236 = vmatprep.subr.mxu0 0.0
    %1237 = vmatpush1.xpose.msra.mxu0 0.0
    %1238 = vmatprep.subr.mxu0 0.0
    %1239 = vmatpush1.xpose.msra.mxu0 0.0
    %1240 = vmatprep.subr.mxu0 0.0
    %1241 = vmatpush1.xpose.msra.mxu0 0.0
    %1242 = vmatprep.subr.mxu0 0.0
    %1243 = vmatpush1.xpose.msra.mxu0 0.0
    %1244 = vmatprep.subr.mxu0 0.0
    %1245 = vmatpush1.xpose.msra.mxu0 0.0
    %1246 = vmatprep.subr.mxu0 0.0
    %1247 = vmatpush1.xpose.msra.mxu0 0.0
    %1248 = vmatprep.subr.mxu0 0.0
    %1249 = vmatpush1.xpose.msra.mxu0 0.0
    %1250 = vmatprep.subr.mxu0 0.0
    %1251 = vmatpush1.xpose.msra.mxu0 0.0
    %1252 = vmatprep.subr.mxu0 0.0
    %1253 = vmatpush1.xpose.msra.mxu0 0.0
    %1254 = vmatprep.subr.mxu0 0.0
    %1255 = vmatpush1.xpose.msra.mxu0 0.0
    %1256 = vmatprep.subr.mxu0 0.0
    %1257 = vmatpush1.xpose.msra.mxu0 0.0
    %1258 = vmatprep.subr.mxu0 0.0
    %1259 = vmatpush1.xpose.msra.mxu0 0.0
    %1260 = vmatprep.mubr.f32.mxu0 0.0
    %v1261 = vand.u32 %v176, 4294901760
    %v1262 = vsub.f32 %v176, %v1261
    %1263 = vmatmul.mubr.f32.gmra.mrb[0].mxu0 %v1262
    %v1264 = vpop.f32.mrb[0].mxu0
    %v1265 = vadd.f32 %v1161, %v1264
    %v1266 = vpop.f32.mrb[0].mxu0
    %1267 = vdwg.mxu0
    %1268 = vmatprep.subr.mxu0 0.0
    %v1269 = vand.u32 %v875, 4294901760
    %1270 = vmatpush1.xpose.msra.mxu0 %v1269
    %1271 = vmatprep.subr.mxu0 0.0
    %v1272 = vand.u32 %v878, 4294901760
    %1273 = vmatpush1.xpose.msra.mxu0 %v1272
    %1274 = vmatprep.subr.mxu0 0.0
    %v1275 = vand.u32 %v881, 4294901760
    %1276 = vmatpush1.xpose.msra.mxu0 %v1275
    %1277 = vmatprep.subr.mxu0 0.0
    %v1278 = vand.u32 %v884, 4294901760
    %1279 = vmatpush1.xpose.msra.mxu0 %v1278
    %1280 = vmatprep.subr.mxu0 0.0
    %v1281 = vand.u32 %v887, 4294901760
    %1282 = vmatpush1.xpose.msra.mxu0 %v1281
    %1283 = vmatprep.subr.mxu0 0.0
    %v1284 = vand.u32 %v890, 4294901760
    %1285 = vmatpush1.xpose.msra.mxu0 %v1284
    %1286 = vmatprep.subr.mxu0 0.0
    %v1287 = vand.u32 %v893, 4294901760
    %1288 = vmatpush1.xpose.msra.mxu0 %v1287
    %1289 = vmatprep.subr.mxu0 0.0
    %v1290 = vand.u32 %v896, 4294901760
    %1291 = vmatpush1.xpose.msra.mxu0 %v1290
    %1292 = vmatprep.subr.mxu0 0.0
    %v1293 = vand.u32 %v899, 4294901760
    %1294 = vmatpush1.xpose.msra.mxu0 %v1293
    %1295 = vmatprep.subr.mxu0 0.0
    %v1296 = vand.u32 %v902, 4294901760
    %1297 = vmatpush1.xpose.msra.mxu0 %v1296
    %1298 = vmatprep.subr.mxu0 0.0
    %v1299 = vand.u32 %v905, 4294901760
    %1300 = vmatpush1.xpose.msra.mxu0 %v1299
    %1301 = vmatprep.subr.mxu0 0.0
    %v1302 = vand.u32 %v908, 4294901760
    %1303 = vmatpush1.xpose.msra.mxu0 %v1302
    %1304 = vmatprep.subr.mxu0 0.0
    %v1305 = vand.u32 %v911, 4294901760
    %1306 = vmatpush1.xpose.msra.mxu0 %v1305
    %1307 = vmatprep.subr.mxu0 0.0
    %v1308 = vand.u32 %v914, 4294901760
    %1309 = vmatpush1.xpose.msra.mxu0 %v1308
    %1310 = vmatprep.subr.mxu0 0.0
    %v1311 = vand.u32 %v917, 4294901760
    %1312 = vmatpush1.xpose.msra.mxu0 %v1311
    %1313 = vmatprep.subr.mxu0 0.0
    %v1314 = vand.u32 %v920, 4294901760
    %1315 = vmatpush1.xpose.msra.mxu0 %v1314
    %1316 = vmatprep.subr.mxu0 0.0
    %1317 = vmatpush1.xpose.msra.mxu0 0.0
    %1318 = vmatprep.subr.mxu0 0.0
    %1319 = vmatpush1.xpose.msra.mxu0 0.0
    %1320 = vmatprep.subr.mxu0 0.0
    %1321 = vmatpush1.xpose.msra.mxu0 0.0
    %1322 = vmatprep.subr.mxu0 0.0
    %1323 = vmatpush1.xpose.msra.mxu0 0.0
    %1324 = vmatprep.subr.mxu0 0.0
    %1325 = vmatpush1.xpose.msra.mxu0 0.0
    %1326 = vmatprep.subr.mxu0 0.0
    %1327 = vmatpush1.xpose.msra.mxu0 0.0
    %1328 = vmatprep.subr.mxu0 0.0
    %1329 = vmatpush1.xpose.msra.mxu0 0.0
    %1330 = vmatprep.subr.mxu0 0.0
    %1331 = vmatpush1.xpose.msra.mxu0 0.0
    %1332 = vmatprep.subr.mxu0 0.0
    %1333 = vmatpush1.xpose.msra.mxu0 0.0
    %1334 = vmatprep.subr.mxu0 0.0
    %1335 = vmatpush1.xpose.msra.mxu0 0.0
    %1336 = vmatprep.subr.mxu0 0.0
    %1337 = vmatpush1.xpose.msra.mxu0 0.0
    %1338 = vmatprep.subr.mxu0 0.0
    %1339 = vmatpush1.xpose.msra.mxu0 0.0
    %1340 = vmatprep.subr.mxu0 0.0
    %1341 = vmatpush1.xpose.msra.mxu0 0.0
    %1342 = vmatprep.subr.mxu0 0.0
    %1343 = vmatpush1.xpose.msra.mxu0 0.0
    %1344 = vmatprep.subr.mxu0 0.0
    %1345 = vmatpush1.xpose.msra.mxu0 0.0
    %1346 = vmatprep.subr.mxu0 0.0
    %1347 = vmatpush1.xpose.msra.mxu0 0.0
    %1348 = vmatprep.mubr.f32.mxu0 0.0
    %v1349 = vand.u32 %v176, 4294901760
    %v1350 = vsub.f32 %v176, %v1349
    %v1351 = vand.u32 %v1350, 4294901760
    %1352 = vmatmul.mubr.f32.gmra.mrb[0].mxu0 %v1351
    %v1353 = vpop.f32.mrb[0].mxu0
    %v1354 = vadd.f32 %v1265, %v1353
    %v1355 = vpop.f32.mrb[0].mxu0
    %1356 = vdwg.mxu0
    %1357 = vmatprep.subr.mxu0 0.0
    %v1358 = vand.u32 %v875, 4294901760
    %v1359 = vsub.f32 %v875, %v1358
    %v1360 = vand.u32 %v1359, 4294901760
    %1361 = vmatpush1.xpose.msra.mxu0 %v1360
    %1362 = vmatprep.subr.mxu0 0.0
    %v1363 = vand.u32 %v878, 4294901760
    %v1364 = vsub.f32 %v878, %v1363
    %v1365 = vand.u32 %v1364, 4294901760
    %1366 = vmatpush1.xpose.msra.mxu0 %v1365
    %1367 = vmatprep.subr.mxu0 0.0
    %v1368 = vand.u32 %v881, 4294901760
    %v1369 = vsub.f32 %v881, %v1368
    %v1370 = vand.u32 %v1369, 4294901760
    %1371 = vmatpush1.xpose.msra.mxu0 %v1370
    %1372 = vmatprep.subr.mxu0 0.0
    %v1373 = vand.u32 %v884, 4294901760
    %v1374 = vsub.f32 %v884, %v1373
    %v1375 = vand.u32 %v1374, 4294901760
    %1376 = vmatpush1.xpose.msra.mxu0 %v1375
    %1377 = vmatprep.subr.mxu0 0.0
    %v1378 = vand.u32 %v887, 4294901760
    %v1379 = vsub.f32 %v887, %v1378
    %v1380 = vand.u32 %v1379, 4294901760
    %1381 = vmatpush1.xpose.msra.mxu0 %v1380
    %1382 = vmatprep.subr.mxu0 0.0
    %v1383 = vand.u32 %v890, 4294901760
    %v1384 = vsub.f32 %v890, %v1383
    %v1385 = vand.u32 %v1384, 4294901760
    %1386 = vmatpush1.xpose.msra.mxu0 %v1385
    %1387 = vmatprep.subr.mxu0 0.0
    %v1388 = vand.u32 %v893, 4294901760
    %v1389 = vsub.f32 %v893, %v1388
    %v1390 = vand.u32 %v1389, 4294901760
    %1391 = vmatpush1.xpose.msra.mxu0 %v1390
    %1392 = vmatprep.subr.mxu0 0.0
    %v1393 = vand.u32 %v896, 4294901760
    %v1394 = vsub.f32 %v896, %v1393
    %v1395 = vand.u32 %v1394, 4294901760
    %1396 = vmatpush1.xpose.msra.mxu0 %v1395
    %1397 = vmatprep.subr.mxu0 0.0
    %v1398 = vand.u32 %v899, 4294901760
    %v1399 = vsub.f32 %v899, %v1398
    %v1400 = vand.u32 %v1399, 4294901760
    %1401 = vmatpush1.xpose.msra.mxu0 %v1400
    %1402 = vmatprep.subr.mxu0 0.0
    %v1403 = vand.u32 %v902, 4294901760
    %v1404 = vsub.f32 %v902, %v1403
    %v1405 = vand.u32 %v1404, 4294901760
    %1406 = vmatpush1.xpose.msra.mxu0 %v1405
    %1407 = vmatprep.subr.mxu0 0.0
    %v1408 = vand.u32 %v905, 4294901760
    %v1409 = vsub.f32 %v905, %v1408
    %v1410 = vand.u32 %v1409, 4294901760
    %1411 = vmatpush1.xpose.msra.mxu0 %v1410
    %1412 = vmatprep.subr.mxu0 0.0
    %v1413 = vand.u32 %v908, 4294901760
    %v1414 = vsub.f32 %v908, %v1413
    %v1415 = vand.u32 %v1414, 4294901760
    %1416 = vmatpush1.xpose.msra.mxu0 %v1415
    %1417 = vmatprep.subr.mxu0 0.0
    %v1418 = vand.u32 %v911, 4294901760
    %v1419 = vsub.f32 %v911, %v1418
    %v1420 = vand.u32 %v1419, 4294901760
    %1421 = vmatpush1.xpose.msra.mxu0 %v1420
    %1422 = vmatprep.subr.mxu0 0.0
    %v1423 = vand.u32 %v914, 4294901760
    %v1424 = vsub.f32 %v914, %v1423
    %v1425 = vand.u32 %v1424, 4294901760
    %1426 = vmatpush1.xpose.msra.mxu0 %v1425
    %1427 = vmatprep.subr.mxu0 0.0
    %v1428 = vand.u32 %v917, 4294901760
    %v1429 = vsub.f32 %v917, %v1428
    %v1430 = vand.u32 %v1429, 4294901760
    %1431 = vmatpush1.xpose.msra.mxu0 %v1430
    %1432 = vmatprep.subr.mxu0 0.0
    %v1433 = vand.u32 %v920, 4294901760
    %v1434 = vsub.f32 %v920, %v1433
    %v1435 = vand.u32 %v1434, 4294901760
    %1436 = vmatpush1.xpose.msra.mxu0 %v1435
    %1437 = vmatprep.subr.mxu0 0.0
    %1438 = vmatpush1.xpose.msra.mxu0 0.0
    %1439 = vmatprep.subr.mxu0 0.0
    %1440 = vmatpush1.xpose.msra.mxu0 0.0
    %1441 = vmatprep.subr.mxu0 0.0
    %1442 = vmatpush1.xpose.msra.mxu0 0.0
    %1443 = vmatprep.subr.mxu0 0.0
    %1444 = vmatpush1.xpose.msra.mxu0 0.0
    %1445 = vmatprep.subr.mxu0 0.0
    %1446 = vmatpush1.xpose.msra.mxu0 0.0
    %1447 = vmatprep.subr.mxu0 0.0
    %1448 = vmatpush1.xpose.msra.mxu0 0.0
    %1449 = vmatprep.subr.mxu0 0.0
    %1450 = vmatpush1.xpose.msra.mxu0 0.0
    %1451 = vmatprep.subr.mxu0 0.0
    %1452 = vmatpush1.xpose.msra.mxu0 0.0
    %1453 = vmatprep.subr.mxu0 0.0
    %1454 = vmatpush1.xpose.msra.mxu0 0.0
    %1455 = vmatprep.subr.mxu0 0.0
    %1456 = vmatpush1.xpose.msra.mxu0 0.0
    %1457 = vmatprep.subr.mxu0 0.0
    %1458 = vmatpush1.xpose.msra.mxu0 0.0
    %1459 = vmatprep.subr.mxu0 0.0
    %1460 = vmatpush1.xpose.msra.mxu0 0.0
    %1461 = vmatprep.subr.mxu0 0.0
    %1462 = vmatpush1.xpose.msra.mxu0 0.0
    %1463 = vmatprep.subr.mxu0 0.0
    %1464 = vmatpush1.xpose.msra.mxu0 0.0
    %1465 = vmatprep.subr.mxu0 0.0
    %1466 = vmatpush1.xpose.msra.mxu0 0.0
    %1467 = vmatprep.subr.mxu0 0.0
    %1468 = vmatpush1.xpose.msra.mxu0 0.0
    %1469 = vmatprep.mubr.f32.mxu0 0.0
    %v1470 = vand.u32 %v176, 4294901760
    %1471 = vmatmul.mubr.f32.gmra.mrb[0].mxu0 %v1470
    %v1472 = vpop.f32.mrb[0].mxu0
    %v1473 = vadd.f32 %v1354, %v1472
    %v1474 = vpop.f32.mrb[0].mxu0
    %1475 = vdwg.mxu0
    %1476 = vmatprep.subr.mxu0 0.0
    %v1477 = vand.u32 %v875, 4294901760
    %1478 = vmatpush1.xpose.msra.mxu0 %v1477
    %1479 = vmatprep.subr.mxu0 0.0
    %v1480 = vand.u32 %v878, 4294901760
    %1481 = vmatpush1.xpose.msra.mxu0 %v1480
    %1482 = vmatprep.subr.mxu0 0.0
    %v1483 = vand.u32 %v881, 4294901760
    %1484 = vmatpush1.xpose.msra.mxu0 %v1483
    %1485 = vmatprep.subr.mxu0 0.0
    %v1486 = vand.u32 %v884, 4294901760
    %1487 = vmatpush1.xpose.msra.mxu0 %v1486
    %1488 = vmatprep.subr.mxu0 0.0
    %v1489 = vand.u32 %v887, 4294901760
    %1490 = vmatpush1.xpose.msra.mxu0 %v1489
    %1491 = vmatprep.subr.mxu0 0.0
    %v1492 = vand.u32 %v890, 4294901760
    %1493 = vmatpush1.xpose.msra.mxu0 %v1492
    %1494 = vmatprep.subr.mxu0 0.0
    %v1495 = vand.u32 %v893, 4294901760
    %1496 = vmatpush1.xpose.msra.mxu0 %v1495
    %1497 = vmatprep.subr.mxu0 0.0
    %v1498 = vand.u32 %v896, 4294901760
    %1499 = vmatpush1.xpose.msra.mxu0 %v1498
    %1500 = vmatprep.subr.mxu0 0.0
    %v1501 = vand.u32 %v899, 4294901760
    %1502 = vmatpush1.xpose.msra.mxu0 %v1501
    %1503 = vmatprep.subr.mxu0 0.0
    %v1504 = vand.u32 %v902, 4294901760
    %1505 = vmatpush1.xpose.msra.mxu0 %v1504
    %1506 = vmatprep.subr.mxu0 0.0
    %v1507 = vand.u32 %v905, 4294901760
    %1508 = vmatpush1.xpose.msra.mxu0 %v1507
    %1509 = vmatprep.subr.mxu0 0.0
    %v1510 = vand.u32 %v908, 4294901760
    %1511 = vmatpush1.xpose.msra.mxu0 %v1510
    %1512 = vmatprep.subr.mxu0 0.0
    %v1513 = vand.u32 %v911, 4294901760
    %1514 = vmatpush1.xpose.msra.mxu0 %v1513
    %1515 = vmatprep.subr.mxu0 0.0
    %v1516 = vand.u32 %v914, 4294901760
    %1517 = vmatpush1.xpose.msra.mxu0 %v1516
    %1518 = vmatprep.subr.mxu0 0.0
    %v1519 = vand.u32 %v917, 4294901760
    %1520 = vmatpush1.xpose.msra.mxu0 %v1519
    %1521 = vmatprep.subr.mxu0 0.0
    %v1522 = vand.u32 %v920, 4294901760
    %1523 = vmatpush1.xpose.msra.mxu0 %v1522
    %1524 = vmatprep.subr.mxu0 0.0
    %1525 = vmatpush1.xpose.msra.mxu0 0.0
    %1526 = vmatprep.subr.mxu0 0.0
    %1527 = vmatpush1.xpose.msra.mxu0 0.0
    %1528 = vmatprep.subr.mxu0 0.0
    %1529 = vmatpush1.xpose.msra.mxu0 0.0
    %1530 = vmatprep.subr.mxu0 0.0
    %1531 = vmatpush1.xpose.msra.mxu0 0.0
    %1532 = vmatprep.subr.mxu0 0.0
    %1533 = vmatpush1.xpose.msra.mxu0 0.0
    %1534 = vmatprep.subr.mxu0 0.0
    %1535 = vmatpush1.xpose.msra.mxu0 0.0
    %1536 = vmatprep.subr.mxu0 0.0
    %1537 = vmatpush1.xpose.msra.mxu0 0.0
    %1538 = vmatprep.subr.mxu0 0.0
    %1539 = vmatpush1.xpose.msra.mxu0 0.0
    %1540 = vmatprep.subr.mxu0 0.0
    %1541 = vmatpush1.xpose.msra.mxu0 0.0
    %1542 = vmatprep.subr.mxu0 0.0
    %1543 = vmatpush1.xpose.msra.mxu0 0.0
    %1544 = vmatprep.subr.mxu0 0.0
    %1545 = vmatpush1.xpose.msra.mxu0 0.0
    %1546 = vmatprep.subr.mxu0 0.0
    %1547 = vmatpush1.xpose.msra.mxu0 0.0
    %1548 = vmatprep.subr.mxu0 0.0
    %1549 = vmatpush1.xpose.msra.mxu0 0.0
    %1550 = vmatprep.subr.mxu0 0.0
    %1551 = vmatpush1.xpose.msra.mxu0 0.0
    %1552 = vmatprep.subr.mxu0 0.0
    %1553 = vmatpush1.xpose.msra.mxu0 0.0
    %1554 = vmatprep.subr.mxu0 0.0
    %1555 = vmatpush1.xpose.msra.mxu0 0.0
    %1556 = vmatprep.mubr.f32.mxu0 0.0
    %v1557 = vand.u32 %v176, 4294901760
    %1558 = vmatmul.mubr.f32.gmra.mrb[0].mxu0 %v1557
    %v1559 = vpop.f32.mrb[0].mxu0
    %v1560 = vadd.f32 %v1473, %v1559
    %v1561 = vpop.f32.mrb[0].mxu0
    %1562 = vdwg.mxu0
    %v1563 = vrsqrt.pop %v1560
    %v1564 = vmul.f32 %v1560, %v1563
    %vm1565 = vcmp.eq.f32.partialorder %v1560, inf
    %v1566 = vsel %vm1565, %v1560, %v1564
    %vm1567 = vcmp.eq.f32.partialorder %v1560, 0.0
    %v1568 = vand.u32 %v1560, 2147483648
    %v1569 = vsel %vm1567, %v1568, %v1566
    %v1570 = vsub.f32 %v873, %v109
    %v1571 = vstv %s58
    %v1572 = vadd.f32 %v1570, %v1571
    %v1573 = vmax.f32 %v1572, 0.0
    %v1574 = vsub.f32 %v109, %v1569
    %v1575 = vadd.f32 %v1574, %v1571
    %v1576 = vmax.f32 %v1575, 0.0
    %v1577 = vlaneseq
    %v1578 = vand.u32 %v1577, 127
    %s1579 = smul.u32 0, 128
    %v1580 = vstv %s1579
    %v1581 = vadd.s32 %v1580, %v1578
    %v1582 = vstv %s60
    %vm1583 = vcmp.lt.s32.totalorder %v1581, %v1582
    %vm1584 = vcmp.gt.f32.partialorder %v1573, 0.0
    %vm1585 = vcmp.gt.f32.partialorder %v1576, 0.0
    %vm1586 = vmor %vm1584, %vm1585
    %vm1587 = vmand %vm1586, %vm1583
    %v1588 = vadd.f32 %v1573, %v1576
    %v1589 = vstv %s59
    %v1590 = vmul.f32 %v1589, %v109
    %v1591 = vadd.f32 %v1588, %v1590
    %v1592 = vsel %vm1583, %v1591, 0.0
    %vm1593 = vcmask 1040384
    %v1594 = vsel %vm1593, %v1592, 0.0
    %1595 = vadd.xlane.f32.xlu0 %v1594
    %v1596 = vpop.xlane.xlu0 %1595
    %v1597 = vrot.slane %v1596, 4
    %v1598 = vadd.f32 %v1596, %v1597
    %v1599 = vrot.slane %v1598, 2
    %v1600 = vadd.f32 %v1598, %v1599
    %v1601 = vrot.slane %v1600, 1
    %v1602 = vadd.f32 %v1600, %v1601
    %s1603 = vtos %v1602
    %v1604 = vsel %vm1587, 1.0, 0.0
    %v1605 = vsel %vm1593, %v1604, 0.0
    %1606 = vadd.xlane.f32.xlu0 %v1605
    %v1607 = vpop.xlane.xlu0 %1606
    %v1608 = vrot.slane %v1607, 4
    %v1609 = vadd.f32 %v1607, %v1608
    %v1610 = vrot.slane %v1609, 2
    %v1611 = vadd.f32 %v1609, %v1610
    %v1612 = vrot.slane %v1611, 1
    %v1613 = vadd.f32 %v1611, %v1612
    %s1614 = vtos %v1613
    %v1615 = vstv %s1603
    %1616 = vst [vmem:[#allocation10] sm:$0x1] %v1615
    %v1617 = vstv %s1614
    %1618 = vst [vmem:[#allocation11] sm:$0x1] %v1617
    // Predicated region
    $region26: #{tpu_custom_call.1} parent=1 // pred_check
      _
    $region27: #{tpu_custom_call.1} parent=1 // pred_check_branch
      %1620 = sbr.rel (0) target = $region29
    $region28: #{tpu_custom_call.1} parent=1 // pred_region
      %s1622 = ssub.s32 16, 16
      %1623 = vsyncadd [#allocation7], %s1622
      %s1625 = sshll.u32 [#allocation10], 4
      %s1626 = int_to_ptr.vmem [resolvable:$true] %s1625
      %1628 = dma.vmem_to_hbm [thread:$0]  %s1626, 16, %s6, [#allocation7]
    $region29: #{tpu_custom_call.1} parent=1 // pred_fallthru
      _
    // Predicated region
    $region30: #{tpu_custom_call.1} parent=1 // pred_check
      _
    $region31: #{tpu_custom_call.1} parent=1 // pred_check_branch
      %1630 = sbr.rel (0) target = $region33
    $region32: #{tpu_custom_call.1} parent=1 // pred_region
      %s1632 = ssub.s32 16, 16
      %1633 = vsyncadd [#allocation12], %s1632
      %s1635 = sshll.u32 [#allocation11], 4
      %s1636 = int_to_ptr.vmem [resolvable:$true] %s1635
      %1638 = dma.vmem_to_hbm [thread:$0]  %s1636, 16, %s7, [#allocation12]
    $region33: #{tpu_custom_call.1} parent=1 // pred_fallthru
      _
    // Predicated region
    $region34: #{tpu_custom_call.1} parent=1 // pred_check
      _
    $region35: #{tpu_custom_call.1} parent=1 // pred_check_branch
      %1640 = sbr.rel (0) target = $region37
    $region36: #{tpu_custom_call.1} parent=1 // pred_region
      %1641 = dma.done [#allocation7], 16
    $region37: #{tpu_custom_call.1} parent=1 // pred_fallthru
      _
    // Predicated region
    $region38: #{tpu_custom_call.1} parent=1 // pred_check
      _
    $region39: #{tpu_custom_call.1} parent=1 // pred_check_branch
      %1643 = sbr.rel (0) target = $region41
    $region40: #{tpu_custom_call.1} parent=1 // pred_region
      %1644 = dma.done [#allocation12], 16
    $region41: #{tpu_custom_call.1} parent=1 // pred_fallthru
      _
    %1645 = vsyncpa [#allocation6], 1
    %1646 = vsyncpa [#allocation9], 1
    %1647 = vsyncpa [#allocation7], 1
    %1648 = vsyncpa [#allocation12], 1

</llo_original>
